<compile_context>
chip_gen: v5e
topology: v5e:2x2
jax: 0.10.0
libtpu: 0.0.40
codegen_flags: <defaults>
</compile_context>

<pallas_src>
import jax
import jax.numpy as jnp
from jax import lax
from jax.experimental import pallas as pl
from jax.experimental.pallas import tpu as pltpu


def _round_up(x, m):
    return ((x + m - 1) // m) * m


def bpr_kernel(u_ids_ref, i_ids_ref, j_ids_ref,      # scalar prefetch (SMEM)
               user_tab_hbm, item_tab_hbm, bias_ref,  # HBM, HBM, SMEM
               out_ref,                               # VMEM (1, TB)
               u_buf, i_buf, j_buf, sem):             # scratch
    tb, d = u_buf.shape
    n = u_ids_ref.shape[0]                # number of real samples
    base = pl.program_id(0) * tb

    lane = lax.broadcasted_iota(jnp.int32, (1, tb), 1)
    unroll = tb <= 16

    # ---- Phase 1: issue all 3*TB row gathers; build the lane-dense bias
    # difference row from SMEM scalar reads while the DMAs are in flight. ----
    def issue_body(r, bias_acc):
        s = jnp.minimum(base + r, n - 1)  # clamp padded rows to a valid sample
        u = u_ids_ref[s]
        ii = i_ids_ref[s]
        jj = j_ids_ref[s]
        pltpu.make_async_copy(user_tab_hbm.at[pl.ds(u, 1), :],
                              u_buf.at[pl.ds(r, 1), :], sem.at[0]).start()
        pltpu.make_async_copy(item_tab_hbm.at[pl.ds(ii, 1), :],
                              i_buf.at[pl.ds(r, 1), :], sem.at[1]).start()
        pltpu.make_async_copy(item_tab_hbm.at[pl.ds(jj, 1), :],
                              j_buf.at[pl.ds(r, 1), :], sem.at[2]).start()
        bias_diff = bias_ref[ii] - bias_ref[jj]
        return jnp.where(lane == r, bias_diff, bias_acc)

    bias_row = lax.fori_loop(0, tb, issue_body,
                             jnp.zeros((1, tb), jnp.float32), unroll=unroll)

    # ---- Phase 2: wait for all row gathers.  Wait descriptors only need the
    # destination shape + semaphore, so use a static source slice (no SMEM
    # reads / index clamping on the wait path). ----
    def wait_body(r, carry):
        pltpu.make_async_copy(user_tab_hbm.at[pl.ds(0, 1), :],
                              u_buf.at[pl.ds(r, 1), :], sem.at[0]).wait()
        pltpu.make_async_copy(item_tab_hbm.at[pl.ds(0, 1), :],
                              i_buf.at[pl.ds(r, 1), :], sem.at[1]).wait()
        pltpu.make_async_copy(item_tab_hbm.at[pl.ds(0, 1), :],
                              j_buf.at[pl.ds(r, 1), :], sem.at[2]).wait()
        return carry

    lax.fori_loop(0, tb, wait_body, 0, unroll=unroll)

    # ---- Phase 3: fused item path: sum_d u[b,d] * (i[b,d] - j[b,d]). ----
    prod = u_buf[...] * (i_buf[...] - j_buf[...])        # (TB, D), VPU, f32
    # Row-wise reduction as ones(1,D) . prod^T so the result lands lane-major
    # (1, TB) directly.
    ones_row = jnp.ones((1, d), jnp.float32)
    scores = lax.dot_general(
        ones_row, prod,
        dimension_numbers=(((1,), (1,)), ((), ())),
        precision=lax.Precision.HIGHEST,
        preferred_element_type=jnp.float32)              # (1, TB)
    out_ref[...] = scores + bias_row


def bpr_forward(user, item_i, item_j, user_table, item_table, item_bias):
    """user/item_i/item_j: (B,) int; tables: (NU,D)/(NI,D); item_bias: (NI,) or (NI,1)."""
    B = int(user.shape[0])
    _, D = user_table.shape
    NI = item_table.shape[0]

    tile = 128 if B > 128 else _round_up(B, 8)   # batch tile per grid step
    b_pad = _round_up(B, tile)
    num_tiles = b_pad // tile

    u_ids = user.astype(jnp.int32)
    i_ids = item_i.astype(jnp.int32)
    j_ids = item_j.astype(jnp.int32)
    bias = jnp.asarray(item_bias, jnp.float32).reshape(NI)

    grid_spec = pltpu.PrefetchScalarGridSpec(
        num_scalar_prefetch=3,
        grid=(num_tiles,),
        in_specs=[
            pl.BlockSpec(memory_space=pl.ANY),                  # user table (HBM)
            pl.BlockSpec(memory_space=pl.ANY),                  # item table (HBM)
            pl.BlockSpec(memory_space=pltpu.MemorySpace.SMEM),  # item bias (SMEM)
        ],
        out_specs=pl.BlockSpec((1, tile), lambda t, u, i, j: (0, t)),
        scratch_shapes=[
            pltpu.VMEM((tile, D), jnp.float32),   # gathered user rows
            pltpu.VMEM((tile, D), jnp.float32),   # gathered item_i rows
            pltpu.VMEM((tile, D), jnp.float32),   # gathered item_j rows
            pltpu.SemaphoreType.DMA((3,)),
        ],
    )

    out = pl.pallas_call(
        bpr_kernel,
        out_shape=jax.ShapeDtypeStruct((1, b_pad), jnp.float32),
        grid_spec=grid_spec,
        compiler_params=pltpu.CompilerParams(
            dimension_semantics=("parallel",)),
    )(u_ids, i_ids, j_ids,
      jnp.asarray(user_table, jnp.float32),
      jnp.asarray(item_table, jnp.float32),
      bias)
    return out[0, :B]


if __name__ == "__main__":
    num_users, num_items, factors = 32, 64, 128
    B = 8

    key = jax.random.PRNGKey(0)
    k_u, k_i, k_b, k_uid, k_iid, k_jid = jax.random.split(key, 6)

    # Parameter init mirroring the PyTorch __init__:
    # normal(std=0.01) embeddings, zeros for item_bias.
    user_table = 0.01 * jax.random.normal(k_u, (num_users, factors), jnp.float32)
    item_table = 0.01 * jax.random.normal(k_i, (num_items, factors), jnp.float32)
    item_bias = jnp.zeros((num_items, 1), jnp.float32)
    # TODO(synk): user_bias embedding exists in __init__ but is unused in forward; omitted.

    user = jax.random.randint(k_uid, (B,), 0, num_users, jnp.int32)
    item_i = jax.random.randint(k_iid, (B,), 0, num_items, jnp.int32)
    item_j = jax.random.randint(k_jid, (B,), 0, num_items, jnp.int32)

    def reference(u_tab, i_tab, i_bias):
        u_e = u_tab[user]
        ii_e = i_tab[item_i]
        jj_e = i_tab[item_j]
        b = i_bias.reshape(-1)
        return (jnp.sum(u_e * ii_e, axis=1) + b[item_i]) - \
               (jnp.sum(u_e * jj_e, axis=1) + b[item_j])

    out = jax.block_until_ready(
        bpr_forward(user, item_i, item_j, user_table, item_table, item_bias))
    ref = reference(user_table, item_table, item_bias)
    assert out.shape == (B,)
    assert jnp.allclose(out, ref, atol=1e-5, rtol=1e-5)

    # Second check with non-zero bias so the bias-gather path is exercised.
    item_bias2 = 0.1 * jax.random.normal(k_b, (num_items, 1), jnp.float32)
    out2 = jax.block_until_ready(
        bpr_forward(user, item_i, item_j, user_table, item_table, item_bias2))
    ref2 = reference(user_table, item_table, item_bias2)
    assert jnp.allclose(out2, ref2, atol=1e-5, rtol=1e-5)

    print("KERNEL_OK")
</pallas_src>

<mosaic_0001>
module attributes {stable_mosaic.version = 11 : i64} {
  func.func @bpr_kernel(%arg0: i32, %arg1: memref<8xi32, #tpu.memory_space<smem>>, %arg2: memref<8xi32, #tpu.memory_space<smem>>, %arg3: memref<8xi32, #tpu.memory_space<smem>>, %arg4: memref<32x128xf32, #tpu.memory_space<any>>, %arg5: memref<64x128xf32, #tpu.memory_space<any>>, %arg6: memref<64xf32, #tpu.memory_space<smem>>, %arg7: memref<1x8xf32, #tpu.memory_space<vmem>>, %arg8: memref<8x128xf32, #tpu.memory_space<vmem>>, %arg9: memref<8x128xf32, #tpu.memory_space<vmem>>, %arg10: memref<8x128xf32, #tpu.memory_space<vmem>>, %arg11: memref<3x!tpu.dma_semaphore, #tpu.memory_space<semaphore_mem>>) attributes {dimension_semantics = [#tpu.dimension_semantics<parallel>], iteration_bounds = array<i64: 1>, scalar_prefetch = 3 : i64, scratch_operands = 4 : i64, tpu.core_type = #tpu.core_type<tc>, window_params = [{}, {}, {transform_indices = @transform_2, window_bounds = array<i64: 64>}, {transform_indices = @transform_3, window_bounds = array<i64: 1, 8>}]} {
    %c8_i32 = arith.constant 8 : i32
    %0 = arith.muli %arg0, %c8_i32 : i32
    %1 = tpu.iota {dimensions = array<i32: 1>} : vector<1x8xi32>
    %cst = arith.constant 0.000000e+00 : f32
    %2 = vector.broadcast %cst : f32 to vector<1x8xf32>
    %c0_i32 = arith.constant 0 : i32
    %3 = arith.addi %0, %c0_i32 : i32
    %c7_i32 = arith.constant 7 : i32
    %4 = arith.minsi %3, %c7_i32 : i32
    %5 = arith.index_cast %4 : i32 to index
    %6 = memref.load %arg1[%5] : memref<8xi32, #tpu.memory_space<smem>>
    %7 = arith.index_cast %4 : i32 to index
    %8 = memref.load %arg2[%7] : memref<8xi32, #tpu.memory_space<smem>>
    %9 = arith.index_cast %4 : i32 to index
    %10 = memref.load %arg3[%9] : memref<8xi32, #tpu.memory_space<smem>>
    %c0_i32_0 = arith.constant 0 : i32
    %c0_i32_1 = arith.constant 0 : i32
    %11 = tpu.memref_slice %arg4[%6, %c0_i32_1] : memref<32x128xf32, #tpu.memory_space<any>> -> memref<1x128xf32, #tpu.memory_space<any>>
    %c0_i32_2 = arith.constant 0 : i32
    %12 = tpu.memref_slice %arg8[%c0_i32, %c0_i32_2] : memref<8x128xf32, #tpu.memory_space<vmem>> -> memref<1x128xf32, #tpu.memory_space<vmem>>
    %13 = tpu.memref_slice %arg11[%c0_i32_0] : memref<3x!tpu.dma_semaphore, #tpu.memory_space<semaphore_mem>> -> memref<1x!tpu.dma_semaphore, #tpu.memory_space<semaphore_mem>>
    %14 = tpu.memref_squeeze %13 : memref<1x!tpu.dma_semaphore, #tpu.memory_space<semaphore_mem>> -> memref<!tpu.dma_semaphore, #tpu.memory_space<semaphore_mem>>
    tpu.enqueue_dma source(%11 : memref<1x128xf32, #tpu.memory_space<any>>) target(%12 : memref<1x128xf32, #tpu.memory_space<vmem>>) target_semaphore(%14 : memref<!tpu.dma_semaphore, #tpu.memory_space<semaphore_mem>>)
    %c1_i32 = arith.constant 1 : i32
    %c0_i32_3 = arith.constant 0 : i32
    %15 = tpu.memref_slice %arg5[%8, %c0_i32_3] : memref<64x128xf32, #tpu.memory_space<any>> -> memref<1x128xf32, #tpu.memory_space<any>>
    %c0_i32_4 = arith.constant 0 : i32
    %16 = tpu.memref_slice %arg9[%c0_i32, %c0_i32_4] : memref<8x128xf32, #tpu.memory_space<vmem>> -> memref<1x128xf32, #tpu.memory_space<vmem>>
    %17 = tpu.memref_slice %arg11[%c1_i32] : memref<3x!tpu.dma_semaphore, #tpu.memory_space<semaphore_mem>> -> memref<1x!tpu.dma_semaphore, #tpu.memory_space<semaphore_mem>>
    %18 = tpu.memref_squeeze %17 : memref<1x!tpu.dma_semaphore, #tpu.memory_space<semaphore_mem>> -> memref<!tpu.dma_semaphore, #tpu.memory_space<semaphore_mem>>
    tpu.enqueue_dma source(%15 : memref<1x128xf32, #tpu.memory_space<any>>) target(%16 : memref<1x128xf32, #tpu.memory_space<vmem>>) target_semaphore(%18 : memref<!tpu.dma_semaphore, #tpu.memory_space<semaphore_mem>>)
    %c2_i32 = arith.constant 2 : i32
    %c0_i32_5 = arith.constant 0 : i32
    %19 = tpu.memref_slice %arg5[%10, %c0_i32_5] : memref<64x128xf32, #tpu.memory_space<any>> -> memref<1x128xf32, #tpu.memory_space<any>>
    %c0_i32_6 = arith.constant 0 : i32
    %20 = tpu.memref_slice %arg10[%c0_i32, %c0_i32_6] : memref<8x128xf32, #tpu.memory_space<vmem>> -> memref<1x128xf32, #tpu.memory_space<vmem>>
    %21 = tpu.memref_slice %arg11[%c2_i32] : memref<3x!tpu.dma_semaphore, #tpu.memory_space<semaphore_mem>> -> memref<1x!tpu.dma_semaphore, #tpu.memory_space<semaphore_mem>>
    %22 = tpu.memref_squeeze %21 : memref<1x!tpu.dma_semaphore, #tpu.memory_space<semaphore_mem>> -> memref<!tpu.dma_semaphore, #tpu.memory_space<semaphore_mem>>
    tpu.enqueue_dma source(%19 : memref<1x128xf32, #tpu.memory_space<any>>) target(%20 : memref<1x128xf32, #tpu.memory_space<vmem>>) target_semaphore(%22 : memref<!tpu.dma_semaphore, #tpu.memory_space<semaphore_mem>>)
    %23 = arith.index_cast %8 : i32 to index
    %24 = memref.load %arg6[%23] : memref<64xf32, #tpu.memory_space<smem>>
    %25 = arith.index_cast %10 : i32 to index
    %26 = memref.load %arg6[%25] : memref<64xf32, #tpu.memory_space<smem>>
    %27 = arith.subf %24, %26 : f32
    %28 = vector.broadcast %c0_i32 : i32 to vector<1x8xi32>
    %29 = arith.cmpi eq, %1, %28 : vector<1x8xi32>
    %30 = vector.broadcast %27 : f32 to vector<1x8xf32>
    %31 = arith.select %29, %30, %2 : vector<1x8xi1>, vector<1x8xf32>
    %c1_i32_7 = arith.constant 1 : i32
    %32 = arith.addi %0, %c1_i32_7 : i32
    %c7_i32_8 = arith.constant 7 : i32
    %33 = arith.minsi %32, %c7_i32_8 : i32
    %34 = arith.index_cast %33 : i32 to index
    %35 = memref.load %arg1[%34] : memref<8xi32, #tpu.memory_space<smem>>
    %36 = arith.index_cast %33 : i32 to index
    %37 = memref.load %arg2[%36] : memref<8xi32, #tpu.memory_space<smem>>
    %38 = arith.index_cast %33 : i32 to index
    %39 = memref.load %arg3[%38] : memref<8xi32, #tpu.memory_space<smem>>
    %c0_i32_9 = arith.constant 0 : i32
    %c0_i32_10 = arith.constant 0 : i32
    %40 = tpu.memref_slice %arg4[%35, %c0_i32_10] : memref<32x128xf32, #tpu.memory_space<any>> -> memref<1x128xf32, #tpu.memory_space<any>>
    %c0_i32_11 = arith.constant 0 : i32
    %41 = tpu.memref_slice %arg8[%c1_i32_7, %c0_i32_11] : memref<8x128xf32, #tpu.memory_space<vmem>> -> memref<1x128xf32, #tpu.memory_space<vmem>>
    %42 = tpu.memref_slice %arg11[%c0_i32_9] : memref<3x!tpu.dma_semaphore, #tpu.memory_space<semaphore_mem>> -> memref<1x!tpu.dma_semaphore, #tpu.memory_space<semaphore_mem>>
    %43 = tpu.memref_squeeze %42 : memref<1x!tpu.dma_semaphore, #tpu.memory_space<semaphore_mem>> -> memref<!tpu.dma_semaphore, #tpu.memory_space<semaphore_mem>>
    tpu.enqueue_dma source(%40 : memref<1x128xf32, #tpu.memory_space<any>>) target(%41 : memref<1x128xf32, #tpu.memory_space<vmem>>) target_semaphore(%43 : memref<!tpu.dma_semaphore, #tpu.memory_space<semaphore_mem>>)
    %c1_i32_12 = arith.constant 1 : i32
    %c0_i32_13 = arith.constant 0 : i32
    %44 = tpu.memref_slice %arg5[%37, %c0_i32_13] : memref<64x128xf32, #tpu.memory_space<any>> -> memref<1x128xf32, #tpu.memory_space<any>>
    %c0_i32_14 = arith.constant 0 : i32
    %45 = tpu.memref_slice %arg9[%c1_i32_7, %c0_i32_14] : memref<8x128xf32, #tpu.memory_space<vmem>> -> memref<1x128xf32, #tpu.memory_space<vmem>>
    %46 = tpu.memref_slice %arg11[%c1_i32_12] : memref<3x!tpu.dma_semaphore, #tpu.memory_space<semaphore_mem>> -> memref<1x!tpu.dma_semaphore, #tpu.memory_space<semaphore_mem>>
    %47 = tpu.memref_squeeze %46 : memref<1x!tpu.dma_semaphore, #tpu.memory_space<semaphore_mem>> -> memref<!tpu.dma_semaphore, #tpu.memory_space<semaphore_mem>>
    tpu.enqueue_dma source(%44 : memref<1x128xf32, #tpu.memory_space<any>>) target(%45 : memref<1x128xf32, #tpu.memory_space<vmem>>) target_semaphore(%47 : memref<!tpu.dma_semaphore, #tpu.memory_space<semaphore_mem>>)
    %c2_i32_15 = arith.constant 2 : i32
    %c0_i32_16 = arith.constant 0 : i32
    %48 = tpu.memref_slice %arg5[%39, %c0_i32_16] : memref<64x128xf32, #tpu.memory_space<any>> -> memref<1x128xf32, #tpu.memory_space<any>>
    %c0_i32_17 = arith.constant 0 : i32
    %49 = tpu.memref_slice %arg10[%c1_i32_7, %c0_i32_17] : memref<8x128xf32, #tpu.memory_space<vmem>> -> memref<1x128xf32, #tpu.memory_space<vmem>>
    %50 = tpu.memref_slice %arg11[%c2_i32_15] : memref<3x!tpu.dma_semaphore, #tpu.memory_space<semaphore_mem>> -> memref<1x!tpu.dma_semaphore, #tpu.memory_space<semaphore_mem>>
    %51 = tpu.memref_squeeze %50 : memref<1x!tpu.dma_semaphore, #tpu.memory_space<semaphore_mem>> -> memref<!tpu.dma_semaphore, #tpu.memory_space<semaphore_mem>>
    tpu.enqueue_dma source(%48 : memref<1x128xf32, #tpu.memory_space<any>>) target(%49 : memref<1x128xf32, #tpu.memory_space<vmem>>) target_semaphore(%51 : memref<!tpu.dma_semaphore, #tpu.memory_space<semaphore_mem>>)
    %52 = arith.index_cast %37 : i32 to index
    %53 = memref.load %arg6[%52] : memref<64xf32, #tpu.memory_space<smem>>
    %54 = arith.index_cast %39 : i32 to index
    %55 = memref.load %arg6[%54] : memref<64xf32, #tpu.memory_space<smem>>
    %56 = arith.subf %53, %55 : f32
    %57 = vector.broadcast %c1_i32_7 : i32 to vector<1x8xi32>
    %58 = arith.cmpi eq, %1, %57 : vector<1x8xi32>
    %59 = vector.broadcast %56 : f32 to vector<1x8xf32>
    %60 = arith.select %58, %59, %31 : vector<1x8xi1>, vector<1x8xf32>
    %c2_i32_18 = arith.constant 2 : i32
    %61 = arith.addi %0, %c2_i32_18 : i32
    %c7_i32_19 = arith.constant 7 : i32
    %62 = arith.minsi %61, %c7_i32_19 : i32
    %63 = arith.index_cast %62 : i32 to index
    %64 = memref.load %arg1[%63] : memref<8xi32, #tpu.memory_space<smem>>
    %65 = arith.index_cast %62 : i32 to index
    %66 = memref.load %arg2[%65] : memref<8xi32, #tpu.memory_space<smem>>
    %67 = arith.index_cast %62 : i32 to index
    %68 = memref.load %arg3[%67] : memref<8xi32, #tpu.memory_space<smem>>
    %c0_i32_20 = arith.constant 0 : i32
    %c0_i32_21 = arith.constant 0 : i32
    %69 = tpu.memref_slice %arg4[%64, %c0_i32_21] : memref<32x128xf32, #tpu.memory_space<any>> -> memref<1x128xf32, #tpu.memory_space<any>>
    %c0_i32_22 = arith.constant 0 : i32
    %70 = tpu.memref_slice %arg8[%c2_i32_18, %c0_i32_22] : memref<8x128xf32, #tpu.memory_space<vmem>> -> memref<1x128xf32, #tpu.memory_space<vmem>>
    %71 = tpu.memref_slice %arg11[%c0_i32_20] : memref<3x!tpu.dma_semaphore, #tpu.memory_space<semaphore_mem>> -> memref<1x!tpu.dma_semaphore, #tpu.memory_space<semaphore_mem>>
    %72 = tpu.memref_squeeze %71 : memref<1x!tpu.dma_semaphore, #tpu.memory_space<semaphore_mem>> -> memref<!tpu.dma_semaphore, #tpu.memory_space<semaphore_mem>>
    tpu.enqueue_dma source(%69 : memref<1x128xf32, #tpu.memory_space<any>>) target(%70 : memref<1x128xf32, #tpu.memory_space<vmem>>) target_semaphore(%72 : memref<!tpu.dma_semaphore, #tpu.memory_space<semaphore_mem>>)
    %c1_i32_23 = arith.constant 1 : i32
    %c0_i32_24 = arith.constant 0 : i32
    %73 = tpu.memref_slice %arg5[%66, %c0_i32_24] : memref<64x128xf32, #tpu.memory_space<any>> -> memref<1x128xf32, #tpu.memory_space<any>>
    %c0_i32_25 = arith.constant 0 : i32
    %74 = tpu.memref_slice %arg9[%c2_i32_18, %c0_i32_25] : memref<8x128xf32, #tpu.memory_space<vmem>> -> memref<1x128xf32, #tpu.memory_space<vmem>>
    %75 = tpu.memref_slice %arg11[%c1_i32_23] : memref<3x!tpu.dma_semaphore, #tpu.memory_space<semaphore_mem>> -> memref<1x!tpu.dma_semaphore, #tpu.memory_space<semaphore_mem>>
    %76 = tpu.memref_squeeze %75 : memref<1x!tpu.dma_semaphore, #tpu.memory_space<semaphore_mem>> -> memref<!tpu.dma_semaphore, #tpu.memory_space<semaphore_mem>>
    tpu.enqueue_dma source(%73 : memref<1x128xf32, #tpu.memory_space<any>>) target(%74 : memref<1x128xf32, #tpu.memory_space<vmem>>) target_semaphore(%76 : memref<!tpu.dma_semaphore, #tpu.memory_space<semaphore_mem>>)
    %c2_i32_26 = arith.constant 2 : i32
    %c0_i32_27 = arith.constant 0 : i32
    %77 = tpu.memref_slice %arg5[%68, %c0_i32_27] : memref<64x128xf32, #tpu.memory_space<any>> -> memref<1x128xf32, #tpu.memory_space<any>>
    %c0_i32_28 = arith.constant 0 : i32
    %78 = tpu.memref_slice %arg10[%c2_i32_18, %c0_i32_28] : memref<8x128xf32, #tpu.memory_space<vmem>> -> memref<1x128xf32, #tpu.memory_space<vmem>>
    %79 = tpu.memref_slice %arg11[%c2_i32_26] : memref<3x!tpu.dma_semaphore, #tpu.memory_space<semaphore_mem>> -> memref<1x!tpu.dma_semaphore, #tpu.memory_space<semaphore_mem>>
    %80 = tpu.memref_squeeze %79 : memref<1x!tpu.dma_semaphore, #tpu.memory_space<semaphore_mem>> -> memref<!tpu.dma_semaphore, #tpu.memory_space<semaphore_mem>>
    tpu.enqueue_dma source(%77 : memref<1x128xf32, #tpu.memory_space<any>>) target(%78 : memref<1x128xf32, #tpu.memory_space<vmem>>) target_semaphore(%80 : memref<!tpu.dma_semaphore, #tpu.memory_space<semaphore_mem>>)
    %81 = arith.index_cast %66 : i32 to index
    %82 = memref.load %arg6[%81] : memref<64xf32, #tpu.memory_space<smem>>
    %83 = arith.index_cast %68 : i32 to index
    %84 = memref.load %arg6[%83] : memref<64xf32, #tpu.memory_space<smem>>
    %85 = arith.subf %82, %84 : f32
    %86 = vector.broadcast %c2_i32_18 : i32 to vector<1x8xi32>
    %87 = arith.cmpi eq, %1, %86 : vector<1x8xi32>
    %88 = vector.broadcast %85 : f32 to vector<1x8xf32>
    %89 = arith.select %87, %88, %60 : vector<1x8xi1>, vector<1x8xf32>
    %c3_i32 = arith.constant 3 : i32
    %90 = arith.addi %0, %c3_i32 : i32
    %c7_i32_29 = arith.constant 7 : i32
    %91 = arith.minsi %90, %c7_i32_29 : i32
    %92 = arith.index_cast %91 : i32 to index
    %93 = memref.load %arg1[%92] : memref<8xi32, #tpu.memory_space<smem>>
    %94 = arith.index_cast %91 : i32 to index
    %95 = memref.load %arg2[%94] : memref<8xi32, #tpu.memory_space<smem>>
    %96 = arith.index_cast %91 : i32 to index
    %97 = memref.load %arg3[%96] : memref<8xi32, #tpu.memory_space<smem>>
    %c0_i32_30 = arith.constant 0 : i32
    %c0_i32_31 = arith.constant 0 : i32
    %98 = tpu.memref_slice %arg4[%93, %c0_i32_31] : memref<32x128xf32, #tpu.memory_space<any>> -> memref<1x128xf32, #tpu.memory_space<any>>
    %c0_i32_32 = arith.constant 0 : i32
    %99 = tpu.memref_slice %arg8[%c3_i32, %c0_i32_32] : memref<8x128xf32, #tpu.memory_space<vmem>> -> memref<1x128xf32, #tpu.memory_space<vmem>>
    %100 = tpu.memref_slice %arg11[%c0_i32_30] : memref<3x!tpu.dma_semaphore, #tpu.memory_space<semaphore_mem>> -> memref<1x!tpu.dma_semaphore, #tpu.memory_space<semaphore_mem>>
    %101 = tpu.memref_squeeze %100 : memref<1x!tpu.dma_semaphore, #tpu.memory_space<semaphore_mem>> -> memref<!tpu.dma_semaphore, #tpu.memory_space<semaphore_mem>>
    tpu.enqueue_dma source(%98 : memref<1x128xf32, #tpu.memory_space<any>>) target(%99 : memref<1x128xf32, #tpu.memory_space<vmem>>) target_semaphore(%101 : memref<!tpu.dma_semaphore, #tpu.memory_space<semaphore_mem>>)
    %c1_i32_33 = arith.constant 1 : i32
    %c0_i32_34 = arith.constant 0 : i32
    %102 = tpu.memref_slice %arg5[%95, %c0_i32_34] : memref<64x128xf32, #tpu.memory_space<any>> -> memref<1x128xf32, #tpu.memory_space<any>>
    %c0_i32_35 = arith.constant 0 : i32
    %103 = tpu.memref_slice %arg9[%c3_i32, %c0_i32_35] : memref<8x128xf32, #tpu.memory_space<vmem>> -> memref<1x128xf32, #tpu.memory_space<vmem>>
    %104 = tpu.memref_slice %arg11[%c1_i32_33] : memref<3x!tpu.dma_semaphore, #tpu.memory_space<semaphore_mem>> -> memref<1x!tpu.dma_semaphore, #tpu.memory_space<semaphore_mem>>
    %105 = tpu.memref_squeeze %104 : memref<1x!tpu.dma_semaphore, #tpu.memory_space<semaphore_mem>> -> memref<!tpu.dma_semaphore, #tpu.memory_space<semaphore_mem>>
    tpu.enqueue_dma source(%102 : memref<1x128xf32, #tpu.memory_space<any>>) target(%103 : memref<1x128xf32, #tpu.memory_space<vmem>>) target_semaphore(%105 : memref<!tpu.dma_semaphore, #tpu.memory_space<semaphore_mem>>)
    %c2_i32_36 = arith.constant 2 : i32
    %c0_i32_37 = arith.constant 0 : i32
    %106 = tpu.memref_slice %arg5[%97, %c0_i32_37] : memref<64x128xf32, #tpu.memory_space<any>> -> memref<1x128xf32, #tpu.memory_space<any>>
    %c0_i32_38 = arith.constant 0 : i32
    %107 = tpu.memref_slice %arg10[%c3_i32, %c0_i32_38] : memref<8x128xf32, #tpu.memory_space<vmem>> -> memref<1x128xf32, #tpu.memory_space<vmem>>
    %108 = tpu.memref_slice %arg11[%c2_i32_36] : memref<3x!tpu.dma_semaphore, #tpu.memory_space<semaphore_mem>> -> memref<1x!tpu.dma_semaphore, #tpu.memory_space<semaphore_mem>>
    %109 = tpu.memref_squeeze %108 : memref<1x!tpu.dma_semaphore, #tpu.memory_space<semaphore_mem>> -> memref<!tpu.dma_semaphore, #tpu.memory_space<semaphore_mem>>
    tpu.enqueue_dma source(%106 : memref<1x128xf32, #tpu.memory_space<any>>) target(%107 : memref<1x128xf32, #tpu.memory_space<vmem>>) target_semaphore(%109 : memref<!tpu.dma_semaphore, #tpu.memory_space<semaphore_mem>>)
    %110 = arith.index_cast %95 : i32 to index
    %111 = memref.load %arg6[%110] : memref<64xf32, #tpu.memory_space<smem>>
    %112 = arith.index_cast %97 : i32 to index
    %113 = memref.load %arg6[%112] : memref<64xf32, #tpu.memory_space<smem>>
    %114 = arith.subf %111, %113 : f32
    %115 = vector.broadcast %c3_i32 : i32 to vector<1x8xi32>
    %116 = arith.cmpi eq, %1, %115 : vector<1x8xi32>
    %117 = vector.broadcast %114 : f32 to vector<1x8xf32>
    %118 = arith.select %116, %117, %89 : vector<1x8xi1>, vector<1x8xf32>
    %c4_i32 = arith.constant 4 : i32
    %119 = arith.addi %0, %c4_i32 : i32
    %c7_i32_39 = arith.constant 7 : i32
    %120 = arith.minsi %119, %c7_i32_39 : i32
    %121 = arith.index_cast %120 : i32 to index
    %122 = memref.load %arg1[%121] : memref<8xi32, #tpu.memory_space<smem>>
    %123 = arith.index_cast %120 : i32 to index
    %124 = memref.load %arg2[%123] : memref<8xi32, #tpu.memory_space<smem>>
    %125 = arith.index_cast %120 : i32 to index
    %126 = memref.load %arg3[%125] : memref<8xi32, #tpu.memory_space<smem>>
    %c0_i32_40 = arith.constant 0 : i32
    %c0_i32_41 = arith.constant 0 : i32
    %127 = tpu.memref_slice %arg4[%122, %c0_i32_41] : memref<32x128xf32, #tpu.memory_space<any>> -> memref<1x128xf32, #tpu.memory_space<any>>
    %c0_i32_42 = arith.constant 0 : i32
    %128 = tpu.memref_slice %arg8[%c4_i32, %c0_i32_42] : memref<8x128xf32, #tpu.memory_space<vmem>> -> memref<1x128xf32, #tpu.memory_space<vmem>>
    %129 = tpu.memref_slice %arg11[%c0_i32_40] : memref<3x!tpu.dma_semaphore, #tpu.memory_space<semaphore_mem>> -> memref<1x!tpu.dma_semaphore, #tpu.memory_space<semaphore_mem>>
    %130 = tpu.memref_squeeze %129 : memref<1x!tpu.dma_semaphore, #tpu.memory_space<semaphore_mem>> -> memref<!tpu.dma_semaphore, #tpu.memory_space<semaphore_mem>>
    tpu.enqueue_dma source(%127 : memref<1x128xf32, #tpu.memory_space<any>>) target(%128 : memref<1x128xf32, #tpu.memory_space<vmem>>) target_semaphore(%130 : memref<!tpu.dma_semaphore, #tpu.memory_space<semaphore_mem>>)
    %c1_i32_43 = arith.constant 1 : i32
    %c0_i32_44 = arith.constant 0 : i32
    %131 = tpu.memref_slice %arg5[%124, %c0_i32_44] : memref<64x128xf32, #tpu.memory_space<any>> -> memref<1x128xf32, #tpu.memory_space<any>>
    %c0_i32_45 = arith.constant 0 : i32
    %132 = tpu.memref_slice %arg9[%c4_i32, %c0_i32_45] : memref<8x128xf32, #tpu.memory_space<vmem>> -> memref<1x128xf32, #tpu.memory_space<vmem>>
    %133 = tpu.memref_slice %arg11[%c1_i32_43] : memref<3x!tpu.dma_semaphore, #tpu.memory_space<semaphore_mem>> -> memref<1x!tpu.dma_semaphore, #tpu.memory_space<semaphore_mem>>
    %134 = tpu.memref_squeeze %133 : memref<1x!tpu.dma_semaphore, #tpu.memory_space<semaphore_mem>> -> memref<!tpu.dma_semaphore, #tpu.memory_space<semaphore_mem>>
    tpu.enqueue_dma source(%131 : memref<1x128xf32, #tpu.memory_space<any>>) target(%132 : memref<1x128xf32, #tpu.memory_space<vmem>>) target_semaphore(%134 : memref<!tpu.dma_semaphore, #tpu.memory_space<semaphore_mem>>)
    %c2_i32_46 = arith.constant 2 : i32
    %c0_i32_47 = arith.constant 0 : i32
    %135 = tpu.memref_slice %arg5[%126, %c0_i32_47] : memref<64x128xf32, #tpu.memory_space<any>> -> memref<1x128xf32, #tpu.memory_space<any>>
    %c0_i32_48 = arith.constant 0 : i32
    %136 = tpu.memref_slice %arg10[%c4_i32, %c0_i32_48] : memref<8x128xf32, #tpu.memory_space<vmem>> -> memref<1x128xf32, #tpu.memory_space<vmem>>
    %137 = tpu.memref_slice %arg11[%c2_i32_46] : memref<3x!tpu.dma_semaphore, #tpu.memory_space<semaphore_mem>> -> memref<1x!tpu.dma_semaphore, #tpu.memory_space<semaphore_mem>>
    %138 = tpu.memref_squeeze %137 : memref<1x!tpu.dma_semaphore, #tpu.memory_space<semaphore_mem>> -> memref<!tpu.dma_semaphore, #tpu.memory_space<semaphore_mem>>
    tpu.enqueue_dma source(%135 : memref<1x128xf32, #tpu.memory_space<any>>) target(%136 : memref<1x128xf32, #tpu.memory_space<vmem>>) target_semaphore(%138 : memref<!tpu.dma_semaphore, #tpu.memory_space<semaphore_mem>>)
    %139 = arith.index_cast %124 : i32 to index
    %140 = memref.load %arg6[%139] : memref<64xf32, #tpu.memory_space<smem>>
    %141 = arith.index_cast %126 : i32 to index
    %142 = memref.load %arg6[%141] : memref<64xf32, #tpu.memory_space<smem>>
    %143 = arith.subf %140, %142 : f32
    %144 = vector.broadcast %c4_i32 : i32 to vector<1x8xi32>
    %145 = arith.cmpi eq, %1, %144 : vector<1x8xi32>
    %146 = vector.broadcast %143 : f32 to vector<1x8xf32>
    %147 = arith.select %145, %146, %118 : vector<1x8xi1>, vector<1x8xf32>
    %c5_i32 = arith.constant 5 : i32
    %148 = arith.addi %0, %c5_i32 : i32
    %c7_i32_49 = arith.constant 7 : i32
    %149 = arith.minsi %148, %c7_i32_49 : i32
    %150 = arith.index_cast %149 : i32 to index
    %151 = memref.load %arg1[%150] : memref<8xi32, #tpu.memory_space<smem>>
    %152 = arith.index_cast %149 : i32 to index
    %153 = memref.load %arg2[%152] : memref<8xi32, #tpu.memory_space<smem>>
    %154 = arith.index_cast %149 : i32 to index
    %155 = memref.load %arg3[%154] : memref<8xi32, #tpu.memory_space<smem>>
    %c0_i32_50 = arith.constant 0 : i32
    %c0_i32_51 = arith.constant 0 : i32
    %156 = tpu.memref_slice %arg4[%151, %c0_i32_51] : memref<32x128xf32, #tpu.memory_space<any>> -> memref<1x128xf32, #tpu.memory_space<any>>
    %c0_i32_52 = arith.constant 0 : i32
    %157 = tpu.memref_slice %arg8[%c5_i32, %c0_i32_52] : memref<8x128xf32, #tpu.memory_space<vmem>> -> memref<1x128xf32, #tpu.memory_space<vmem>>
    %158 = tpu.memref_slice %arg11[%c0_i32_50] : memref<3x!tpu.dma_semaphore, #tpu.memory_space<semaphore_mem>> -> memref<1x!tpu.dma_semaphore, #tpu.memory_space<semaphore_mem>>
    %159 = tpu.memref_squeeze %158 : memref<1x!tpu.dma_semaphore, #tpu.memory_space<semaphore_mem>> -> memref<!tpu.dma_semaphore, #tpu.memory_space<semaphore_mem>>
    tpu.enqueue_dma source(%156 : memref<1x128xf32, #tpu.memory_space<any>>) target(%157 : memref<1x128xf32, #tpu.memory_space<vmem>>) target_semaphore(%159 : memref<!tpu.dma_semaphore, #tpu.memory_space<semaphore_mem>>)
    %c1_i32_53 = arith.constant 1 : i32
    %c0_i32_54 = arith.constant 0 : i32
    %160 = tpu.memref_slice %arg5[%153, %c0_i32_54] : memref<64x128xf32, #tpu.memory_space<any>> -> memref<1x128xf32, #tpu.memory_space<any>>
    %c0_i32_55 = arith.constant 0 : i32
    %161 = tpu.memref_slice %arg9[%c5_i32, %c0_i32_55] : memref<8x128xf32, #tpu.memory_space<vmem>> -> memref<1x128xf32, #tpu.memory_space<vmem>>
    %162 = tpu.memref_slice %arg11[%c1_i32_53] : memref<3x!tpu.dma_semaphore, #tpu.memory_space<semaphore_mem>> -> memref<1x!tpu.dma_semaphore, #tpu.memory_space<semaphore_mem>>
    %163 = tpu.memref_squeeze %162 : memref<1x!tpu.dma_semaphore, #tpu.memory_space<semaphore_mem>> -> memref<!tpu.dma_semaphore, #tpu.memory_space<semaphore_mem>>
    tpu.enqueue_dma source(%160 : memref<1x128xf32, #tpu.memory_space<any>>) target(%161 : memref<1x128xf32, #tpu.memory_space<vmem>>) target_semaphore(%163 : memref<!tpu.dma_semaphore, #tpu.memory_space<semaphore_mem>>)
    %c2_i32_56 = arith.constant 2 : i32
    %c0_i32_57 = arith.constant 0 : i32
    %164 = tpu.memref_slice %arg5[%155, %c0_i32_57] : memref<64x128xf32, #tpu.memory_space<any>> -> memref<1x128xf32, #tpu.memory_space<any>>
    %c0_i32_58 = arith.constant 0 : i32
    %165 = tpu.memref_slice %arg10[%c5_i32, %c0_i32_58] : memref<8x128xf32, #tpu.memory_space<vmem>> -> memref<1x128xf32, #tpu.memory_space<vmem>>
    %166 = tpu.memref_slice %arg11[%c2_i32_56] : memref<3x!tpu.dma_semaphore, #tpu.memory_space<semaphore_mem>> -> memref<1x!tpu.dma_semaphore, #tpu.memory_space<semaphore_mem>>
    %167 = tpu.memref_squeeze %166 : memref<1x!tpu.dma_semaphore, #tpu.memory_space<semaphore_mem>> -> memref<!tpu.dma_semaphore, #tpu.memory_space<semaphore_mem>>
    tpu.enqueue_dma source(%164 : memref<1x128xf32, #tpu.memory_space<any>>) target(%165 : memref<1x128xf32, #tpu.memory_space<vmem>>) target_semaphore(%167 : memref<!tpu.dma_semaphore, #tpu.memory_space<semaphore_mem>>)
    %168 = arith.index_cast %153 : i32 to index
    %169 = memref.load %arg6[%168] : memref<64xf32, #tpu.memory_space<smem>>
    %170 = arith.index_cast %155 : i32 to index
    %171 = memref.load %arg6[%170] : memref<64xf32, #tpu.memory_space<smem>>
    %172 = arith.subf %169, %171 : f32
    %173 = vector.broadcast %c5_i32 : i32 to vector<1x8xi32>
    %174 = arith.cmpi eq, %1, %173 : vector<1x8xi32>
    %175 = vector.broadcast %172 : f32 to vector<1x8xf32>
    %176 = arith.select %174, %175, %147 : vector<1x8xi1>, vector<1x8xf32>
    %c6_i32 = arith.constant 6 : i32
    %177 = arith.addi %0, %c6_i32 : i32
    %c7_i32_59 = arith.constant 7 : i32
    %178 = arith.minsi %177, %c7_i32_59 : i32
    %179 = arith.index_cast %178 : i32 to index
    %180 = memref.load %arg1[%179] : memref<8xi32, #tpu.memory_space<smem>>
    %181 = arith.index_cast %178 : i32 to index
    %182 = memref.load %arg2[%181] : memref<8xi32, #tpu.memory_space<smem>>
    %183 = arith.index_cast %178 : i32 to index
    %184 = memref.load %arg3[%183] : memref<8xi32, #tpu.memory_space<smem>>
    %c0_i32_60 = arith.constant 0 : i32
    %c0_i32_61 = arith.constant 0 : i32
    %185 = tpu.memref_slice %arg4[%180, %c0_i32_61] : memref<32x128xf32, #tpu.memory_space<any>> -> memref<1x128xf32, #tpu.memory_space<any>>
    %c0_i32_62 = arith.constant 0 : i32
    %186 = tpu.memref_slice %arg8[%c6_i32, %c0_i32_62] : memref<8x128xf32, #tpu.memory_space<vmem>> -> memref<1x128xf32, #tpu.memory_space<vmem>>
    %187 = tpu.memref_slice %arg11[%c0_i32_60] : memref<3x!tpu.dma_semaphore, #tpu.memory_space<semaphore_mem>> -> memref<1x!tpu.dma_semaphore, #tpu.memory_space<semaphore_mem>>
    %188 = tpu.memref_squeeze %187 : memref<1x!tpu.dma_semaphore, #tpu.memory_space<semaphore_mem>> -> memref<!tpu.dma_semaphore, #tpu.memory_space<semaphore_mem>>
    tpu.enqueue_dma source(%185 : memref<1x128xf32, #tpu.memory_space<any>>) target(%186 : memref<1x128xf32, #tpu.memory_space<vmem>>) target_semaphore(%188 : memref<!tpu.dma_semaphore, #tpu.memory_space<semaphore_mem>>)
    %c1_i32_63 = arith.constant 1 : i32
    %c0_i32_64 = arith.constant 0 : i32
    %189 = tpu.memref_slice %arg5[%182, %c0_i32_64] : memref<64x128xf32, #tpu.memory_space<any>> -> memref<1x128xf32, #tpu.memory_space<any>>
    %c0_i32_65 = arith.constant 0 : i32
    %190 = tpu.memref_slice %arg9[%c6_i32, %c0_i32_65] : memref<8x128xf32, #tpu.memory_space<vmem>> -> memref<1x128xf32, #tpu.memory_space<vmem>>
    %191 = tpu.memref_slice %arg11[%c1_i32_63] : memref<3x!tpu.dma_semaphore, #tpu.memory_space<semaphore_mem>> -> memref<1x!tpu.dma_semaphore, #tpu.memory_space<semaphore_mem>>
    %192 = tpu.memref_squeeze %191 : memref<1x!tpu.dma_semaphore, #tpu.memory_space<semaphore_mem>> -> memref<!tpu.dma_semaphore, #tpu.memory_space<semaphore_mem>>
    tpu.enqueue_dma source(%189 : memref<1x128xf32, #tpu.memory_space<any>>) target(%190 : memref<1x128xf32, #tpu.memory_space<vmem>>) target_semaphore(%192 : memref<!tpu.dma_semaphore, #tpu.memory_space<semaphore_mem>>)
    %c2_i32_66 = arith.constant 2 : i32
    %c0_i32_67 = arith.constant 0 : i32
    %193 = tpu.memref_slice %arg5[%184, %c0_i32_67] : memref<64x128xf32, #tpu.memory_space<any>> -> memref<1x128xf32, #tpu.memory_space<any>>
    %c0_i32_68 = arith.constant 0 : i32
    %194 = tpu.memref_slice %arg10[%c6_i32, %c0_i32_68] : memref<8x128xf32, #tpu.memory_space<vmem>> -> memref<1x128xf32, #tpu.memory_space<vmem>>
    %195 = tpu.memref_slice %arg11[%c2_i32_66] : memref<3x!tpu.dma_semaphore, #tpu.memory_space<semaphore_mem>> -> memref<1x!tpu.dma_semaphore, #tpu.memory_space<semaphore_mem>>
    %196 = tpu.memref_squeeze %195 : memref<1x!tpu.dma_semaphore, #tpu.memory_space<semaphore_mem>> -> memref<!tpu.dma_semaphore, #tpu.memory_space<semaphore_mem>>
    tpu.enqueue_dma source(%193 : memref<1x128xf32, #tpu.memory_space<any>>) target(%194 : memref<1x128xf32, #tpu.memory_space<vmem>>) target_semaphore(%196 : memref<!tpu.dma_semaphore, #tpu.memory_space<semaphore_mem>>)
    %197 = arith.index_cast %182 : i32 to index
    %198 = memref.load %arg6[%197] : memref<64xf32, #tpu.memory_space<smem>>
    %199 = arith.index_cast %184 : i32 to index
    %200 = memref.load %arg6[%199] : memref<64xf32, #tpu.memory_space<smem>>
    %201 = arith.subf %198, %200 : f32
    %202 = vector.broadcast %c6_i32 : i32 to vector<1x8xi32>
    %203 = arith.cmpi eq, %1, %202 : vector<1x8xi32>
    %204 = vector.broadcast %201 : f32 to vector<1x8xf32>
    %205 = arith.select %203, %204, %176 : vector<1x8xi1>, vector<1x8xf32>
    %c7_i32_69 = arith.constant 7 : i32
    %206 = arith.addi %0, %c7_i32_69 : i32
    %c7_i32_70 = arith.constant 7 : i32
    %207 = arith.minsi %206, %c7_i32_70 : i32
    %208 = arith.index_cast %207 : i32 to index
    %209 = memref.load %arg1[%208] : memref<8xi32, #tpu.memory_space<smem>>
    %210 = arith.index_cast %207 : i32 to index
    %211 = memref.load %arg2[%210] : memref<8xi32, #tpu.memory_space<smem>>
    %212 = arith.index_cast %207 : i32 to index
    %213 = memref.load %arg3[%212] : memref<8xi32, #tpu.memory_space<smem>>
    %c0_i32_71 = arith.constant 0 : i32
    %c0_i32_72 = arith.constant 0 : i32
    %214 = tpu.memref_slice %arg4[%209, %c0_i32_72] : memref<32x128xf32, #tpu.memory_space<any>> -> memref<1x128xf32, #tpu.memory_space<any>>
    %c0_i32_73 = arith.constant 0 : i32
    %215 = tpu.memref_slice %arg8[%c7_i32_69, %c0_i32_73] : memref<8x128xf32, #tpu.memory_space<vmem>> -> memref<1x128xf32, #tpu.memory_space<vmem>>
    %216 = tpu.memref_slice %arg11[%c0_i32_71] : memref<3x!tpu.dma_semaphore, #tpu.memory_space<semaphore_mem>> -> memref<1x!tpu.dma_semaphore, #tpu.memory_space<semaphore_mem>>
    %217 = tpu.memref_squeeze %216 : memref<1x!tpu.dma_semaphore, #tpu.memory_space<semaphore_mem>> -> memref<!tpu.dma_semaphore, #tpu.memory_space<semaphore_mem>>
    tpu.enqueue_dma source(%214 : memref<1x128xf32, #tpu.memory_space<any>>) target(%215 : memref<1x128xf32, #tpu.memory_space<vmem>>) target_semaphore(%217 : memref<!tpu.dma_semaphore, #tpu.memory_space<semaphore_mem>>)
    %c1_i32_74 = arith.constant 1 : i32
    %c0_i32_75 = arith.constant 0 : i32
    %218 = tpu.memref_slice %arg5[%211, %c0_i32_75] : memref<64x128xf32, #tpu.memory_space<any>> -> memref<1x128xf32, #tpu.memory_space<any>>
    %c0_i32_76 = arith.constant 0 : i32
    %219 = tpu.memref_slice %arg9[%c7_i32_69, %c0_i32_76] : memref<8x128xf32, #tpu.memory_space<vmem>> -> memref<1x128xf32, #tpu.memory_space<vmem>>
    %220 = tpu.memref_slice %arg11[%c1_i32_74] : memref<3x!tpu.dma_semaphore, #tpu.memory_space<semaphore_mem>> -> memref<1x!tpu.dma_semaphore, #tpu.memory_space<semaphore_mem>>
    %221 = tpu.memref_squeeze %220 : memref<1x!tpu.dma_semaphore, #tpu.memory_space<semaphore_mem>> -> memref<!tpu.dma_semaphore, #tpu.memory_space<semaphore_mem>>
    tpu.enqueue_dma source(%218 : memref<1x128xf32, #tpu.memory_space<any>>) target(%219 : memref<1x128xf32, #tpu.memory_space<vmem>>) target_semaphore(%221 : memref<!tpu.dma_semaphore, #tpu.memory_space<semaphore_mem>>)
    %c2_i32_77 = arith.constant 2 : i32
    %c0_i32_78 = arith.constant 0 : i32
    %222 = tpu.memref_slice %arg5[%213, %c0_i32_78] : memref<64x128xf32, #tpu.memory_space<any>> -> memref<1x128xf32, #tpu.memory_space<any>>
    %c0_i32_79 = arith.constant 0 : i32
    %223 = tpu.memref_slice %arg10[%c7_i32_69, %c0_i32_79] : memref<8x128xf32, #tpu.memory_space<vmem>> -> memref<1x128xf32, #tpu.memory_space<vmem>>
    %224 = tpu.memref_slice %arg11[%c2_i32_77] : memref<3x!tpu.dma_semaphore, #tpu.memory_space<semaphore_mem>> -> memref<1x!tpu.dma_semaphore, #tpu.memory_space<semaphore_mem>>
    %225 = tpu.memref_squeeze %224 : memref<1x!tpu.dma_semaphore, #tpu.memory_space<semaphore_mem>> -> memref<!tpu.dma_semaphore, #tpu.memory_space<semaphore_mem>>
    tpu.enqueue_dma source(%222 : memref<1x128xf32, #tpu.memory_space<any>>) target(%223 : memref<1x128xf32, #tpu.memory_space<vmem>>) target_semaphore(%225 : memref<!tpu.dma_semaphore, #tpu.memory_space<semaphore_mem>>)
    %226 = arith.index_cast %211 : i32 to index
    %227 = memref.load %arg6[%226] : memref<64xf32, #tpu.memory_space<smem>>
    %228 = arith.index_cast %213 : i32 to index
    %229 = memref.load %arg6[%228] : memref<64xf32, #tpu.memory_space<smem>>
    %230 = arith.subf %227, %229 : f32
    %231 = vector.broadcast %c7_i32_69 : i32 to vector<1x8xi32>
    %232 = arith.cmpi eq, %1, %231 : vector<1x8xi32>
    %233 = vector.broadcast %230 : f32 to vector<1x8xf32>
    %234 = arith.select %232, %233, %205 : vector<1x8xi1>, vector<1x8xf32>
    %c8_i32_80 = arith.constant 8 : i32
    %c0_i32_81 = arith.constant 0 : i32
    %c0_i32_82 = arith.constant 0 : i32
    %c0_i32_83 = arith.constant 0 : i32
    %c0_i32_84 = arith.constant 0 : i32
    %235 = tpu.memref_slice %arg4[%c0_i32_83, %c0_i32_84] : memref<32x128xf32, #tpu.memory_space<any>> -> memref<1x128xf32, #tpu.memory_space<any>>
    %c0_i32_85 = arith.constant 0 : i32
    %236 = tpu.memref_slice %arg8[%c0_i32_81, %c0_i32_85] : memref<8x128xf32, #tpu.memory_space<vmem>> -> memref<1x128xf32, #tpu.memory_space<vmem>>
    %237 = tpu.memref_slice %arg11[%c0_i32_82] : memref<3x!tpu.dma_semaphore, #tpu.memory_space<semaphore_mem>> -> memref<1x!tpu.dma_semaphore, #tpu.memory_space<semaphore_mem>>
    %238 = tpu.memref_squeeze %237 : memref<1x!tpu.dma_semaphore, #tpu.memory_space<semaphore_mem>> -> memref<!tpu.dma_semaphore, #tpu.memory_space<semaphore_mem>>
    tpu.wait_dma2 semaphore(%238 : memref<!tpu.dma_semaphore, #tpu.memory_space<semaphore_mem>>) src(%235 : memref<1x128xf32, #tpu.memory_space<any>>) dst(%236 : memref<1x128xf32, #tpu.memory_space<vmem>>)
    %c1_i32_86 = arith.constant 1 : i32
    %c0_i32_87 = arith.constant 0 : i32
    %c0_i32_88 = arith.constant 0 : i32
    %239 = tpu.memref_slice %arg5[%c0_i32_87, %c0_i32_88] : memref<64x128xf32, #tpu.memory_space<any>> -> memref<1x128xf32, #tpu.memory_space<any>>
    %c0_i32_89 = arith.constant 0 : i32
    %240 = tpu.memref_slice %arg9[%c0_i32_81, %c0_i32_89] : memref<8x128xf32, #tpu.memory_space<vmem>> -> memref<1x128xf32, #tpu.memory_space<vmem>>
    %241 = tpu.memref_slice %arg11[%c1_i32_86] : memref<3x!tpu.dma_semaphore, #tpu.memory_space<semaphore_mem>> -> memref<1x!tpu.dma_semaphore, #tpu.memory_space<semaphore_mem>>
    %242 = tpu.memref_squeeze %241 : memref<1x!tpu.dma_semaphore, #tpu.memory_space<semaphore_mem>> -> memref<!tpu.dma_semaphore, #tpu.memory_space<semaphore_mem>>
    tpu.wait_dma2 semaphore(%242 : memref<!tpu.dma_semaphore, #tpu.memory_space<semaphore_mem>>) src(%239 : memref<1x128xf32, #tpu.memory_space<any>>) dst(%240 : memref<1x128xf32, #tpu.memory_space<vmem>>)
    %c2_i32_90 = arith.constant 2 : i32
    %c0_i32_91 = arith.constant 0 : i32
    %c0_i32_92 = arith.constant 0 : i32
    %243 = tpu.memref_slice %arg5[%c0_i32_91, %c0_i32_92] : memref<64x128xf32, #tpu.memory_space<any>> -> memref<1x128xf32, #tpu.memory_space<any>>
    %c0_i32_93 = arith.constant 0 : i32
    %244 = tpu.memref_slice %arg10[%c0_i32_81, %c0_i32_93] : memref<8x128xf32, #tpu.memory_space<vmem>> -> memref<1x128xf32, #tpu.memory_space<vmem>>
    %245 = tpu.memref_slice %arg11[%c2_i32_90] : memref<3x!tpu.dma_semaphore, #tpu.memory_space<semaphore_mem>> -> memref<1x!tpu.dma_semaphore, #tpu.memory_space<semaphore_mem>>
    %246 = tpu.memref_squeeze %245 : memref<1x!tpu.dma_semaphore, #tpu.memory_space<semaphore_mem>> -> memref<!tpu.dma_semaphore, #tpu.memory_space<semaphore_mem>>
    tpu.wait_dma2 semaphore(%246 : memref<!tpu.dma_semaphore, #tpu.memory_space<semaphore_mem>>) src(%243 : memref<1x128xf32, #tpu.memory_space<any>>) dst(%244 : memref<1x128xf32, #tpu.memory_space<vmem>>)
    %c1_i32_94 = arith.constant 1 : i32
    %c0_i32_95 = arith.constant 0 : i32
    %c0_i32_96 = arith.constant 0 : i32
    %c0_i32_97 = arith.constant 0 : i32
    %247 = tpu.memref_slice %arg4[%c0_i32_96, %c0_i32_97] : memref<32x128xf32, #tpu.memory_space<any>> -> memref<1x128xf32, #tpu.memory_space<any>>
    %c0_i32_98 = arith.constant 0 : i32
    %248 = tpu.memref_slice %arg8[%c1_i32_94, %c0_i32_98] : memref<8x128xf32, #tpu.memory_space<vmem>> -> memref<1x128xf32, #tpu.memory_space<vmem>>
    %249 = tpu.memref_slice %arg11[%c0_i32_95] : memref<3x!tpu.dma_semaphore, #tpu.memory_space<semaphore_mem>> -> memref<1x!tpu.dma_semaphore, #tpu.memory_space<semaphore_mem>>
    %250 = tpu.memref_squeeze %249 : memref<1x!tpu.dma_semaphore, #tpu.memory_space<semaphore_mem>> -> memref<!tpu.dma_semaphore, #tpu.memory_space<semaphore_mem>>
    tpu.wait_dma2 semaphore(%250 : memref<!tpu.dma_semaphore, #tpu.memory_space<semaphore_mem>>) src(%247 : memref<1x128xf32, #tpu.memory_space<any>>) dst(%248 : memref<1x128xf32, #tpu.memory_space<vmem>>)
    %c1_i32_99 = arith.constant 1 : i32
    %c0_i32_100 = arith.constant 0 : i32
    %c0_i32_101 = arith.constant 0 : i32
    %251 = tpu.memref_slice %arg5[%c0_i32_100, %c0_i32_101] : memref<64x128xf32, #tpu.memory_space<any>> -> memref<1x128xf32, #tpu.memory_space<any>>
    %c0_i32_102 = arith.constant 0 : i32
    %252 = tpu.memref_slice %arg9[%c1_i32_94, %c0_i32_102] : memref<8x128xf32, #tpu.memory_space<vmem>> -> memref<1x128xf32, #tpu.memory_space<vmem>>
    %253 = tpu.memref_slice %arg11[%c1_i32_99] : memref<3x!tpu.dma_semaphore, #tpu.memory_space<semaphore_mem>> -> memref<1x!tpu.dma_semaphore, #tpu.memory_space<semaphore_mem>>
    %254 = tpu.memref_squeeze %253 : memref<1x!tpu.dma_semaphore, #tpu.memory_space<semaphore_mem>> -> memref<!tpu.dma_semaphore, #tpu.memory_space<semaphore_mem>>
    tpu.wait_dma2 semaphore(%254 : memref<!tpu.dma_semaphore, #tpu.memory_space<semaphore_mem>>) src(%251 : memref<1x128xf32, #tpu.memory_space<any>>) dst(%252 : memref<1x128xf32, #tpu.memory_space<vmem>>)
    %c2_i32_103 = arith.constant 2 : i32
    %c0_i32_104 = arith.constant 0 : i32
    %c0_i32_105 = arith.constant 0 : i32
    %255 = tpu.memref_slice %arg5[%c0_i32_104, %c0_i32_105] : memref<64x128xf32, #tpu.memory_space<any>> -> memref<1x128xf32, #tpu.memory_space<any>>
    %c0_i32_106 = arith.constant 0 : i32
    %256 = tpu.memref_slice %arg10[%c1_i32_94, %c0_i32_106] : memref<8x128xf32, #tpu.memory_space<vmem>> -> memref<1x128xf32, #tpu.memory_space<vmem>>
    %257 = tpu.memref_slice %arg11[%c2_i32_103] : memref<3x!tpu.dma_semaphore, #tpu.memory_space<semaphore_mem>> -> memref<1x!tpu.dma_semaphore, #tpu.memory_space<semaphore_mem>>
    %258 = tpu.memref_squeeze %257 : memref<1x!tpu.dma_semaphore, #tpu.memory_space<semaphore_mem>> -> memref<!tpu.dma_semaphore, #tpu.memory_space<semaphore_mem>>
    tpu.wait_dma2 semaphore(%258 : memref<!tpu.dma_semaphore, #tpu.memory_space<semaphore_mem>>) src(%255 : memref<1x128xf32, #tpu.memory_space<any>>) dst(%256 : memref<1x128xf32, #tpu.memory_space<vmem>>)
    %c2_i32_107 = arith.constant 2 : i32
    %c0_i32_108 = arith.constant 0 : i32
    %c0_i32_109 = arith.constant 0 : i32
    %c0_i32_110 = arith.constant 0 : i32
    %259 = tpu.memref_slice %arg4[%c0_i32_109, %c0_i32_110] : memref<32x128xf32, #tpu.memory_space<any>> -> memref<1x128xf32, #tpu.memory_space<any>>
    %c0_i32_111 = arith.constant 0 : i32
    %260 = tpu.memref_slice %arg8[%c2_i32_107, %c0_i32_111] : memref<8x128xf32, #tpu.memory_space<vmem>> -> memref<1x128xf32, #tpu.memory_space<vmem>>
    %261 = tpu.memref_slice %arg11[%c0_i32_108] : memref<3x!tpu.dma_semaphore, #tpu.memory_space<semaphore_mem>> -> memref<1x!tpu.dma_semaphore, #tpu.memory_space<semaphore_mem>>
    %262 = tpu.memref_squeeze %261 : memref<1x!tpu.dma_semaphore, #tpu.memory_space<semaphore_mem>> -> memref<!tpu.dma_semaphore, #tpu.memory_space<semaphore_mem>>
    tpu.wait_dma2 semaphore(%262 : memref<!tpu.dma_semaphore, #tpu.memory_space<semaphore_mem>>) src(%259 : memref<1x128xf32, #tpu.memory_space<any>>) dst(%260 : memref<1x128xf32, #tpu.memory_space<vmem>>)
    %c1_i32_112 = arith.constant 1 : i32
    %c0_i32_113 = arith.constant 0 : i32
    %c0_i32_114 = arith.constant 0 : i32
    %263 = tpu.memref_slice %arg5[%c0_i32_113, %c0_i32_114] : memref<64x128xf32, #tpu.memory_space<any>> -> memref<1x128xf32, #tpu.memory_space<any>>
    %c0_i32_115 = arith.constant 0 : i32
    %264 = tpu.memref_slice %arg9[%c2_i32_107, %c0_i32_115] : memref<8x128xf32, #tpu.memory_space<vmem>> -> memref<1x128xf32, #tpu.memory_space<vmem>>
    %265 = tpu.memref_slice %arg11[%c1_i32_112] : memref<3x!tpu.dma_semaphore, #tpu.memory_space<semaphore_mem>> -> memref<1x!tpu.dma_semaphore, #tpu.memory_space<semaphore_mem>>
    %266 = tpu.memref_squeeze %265 : memref<1x!tpu.dma_semaphore, #tpu.memory_space<semaphore_mem>> -> memref<!tpu.dma_semaphore, #tpu.memory_space<semaphore_mem>>
    tpu.wait_dma2 semaphore(%266 : memref<!tpu.dma_semaphore, #tpu.memory_space<semaphore_mem>>) src(%263 : memref<1x128xf32, #tpu.memory_space<any>>) dst(%264 : memref<1x128xf32, #tpu.memory_space<vmem>>)
    %c2_i32_116 = arith.constant 2 : i32
    %c0_i32_117 = arith.constant 0 : i32
    %c0_i32_118 = arith.constant 0 : i32
    %267 = tpu.memref_slice %arg5[%c0_i32_117, %c0_i32_118] : memref<64x128xf32, #tpu.memory_space<any>> -> memref<1x128xf32, #tpu.memory_space<any>>
    %c0_i32_119 = arith.constant 0 : i32
    %268 = tpu.memref_slice %arg10[%c2_i32_107, %c0_i32_119] : memref<8x128xf32, #tpu.memory_space<vmem>> -> memref<1x128xf32, #tpu.memory_space<vmem>>
    %269 = tpu.memref_slice %arg11[%c2_i32_116] : memref<3x!tpu.dma_semaphore, #tpu.memory_space<semaphore_mem>> -> memref<1x!tpu.dma_semaphore, #tpu.memory_space<semaphore_mem>>
    %270 = tpu.memref_squeeze %269 : memref<1x!tpu.dma_semaphore, #tpu.memory_space<semaphore_mem>> -> memref<!tpu.dma_semaphore, #tpu.memory_space<semaphore_mem>>
    tpu.wait_dma2 semaphore(%270 : memref<!tpu.dma_semaphore, #tpu.memory_space<semaphore_mem>>) src(%267 : memref<1x128xf32, #tpu.memory_space<any>>) dst(%268 : memref<1x128xf32, #tpu.memory_space<vmem>>)
    %c3_i32_120 = arith.constant 3 : i32
    %c0_i32_121 = arith.constant 0 : i32
    %c0_i32_122 = arith.constant 0 : i32
    %c0_i32_123 = arith.constant 0 : i32
    %271 = tpu.memref_slice %arg4[%c0_i32_122, %c0_i32_123] : memref<32x128xf32, #tpu.memory_space<any>> -> memref<1x128xf32, #tpu.memory_space<any>>
    %c0_i32_124 = arith.constant 0 : i32
    %272 = tpu.memref_slice %arg8[%c3_i32_120, %c0_i32_124] : memref<8x128xf32, #tpu.memory_space<vmem>> -> memref<1x128xf32, #tpu.memory_space<vmem>>
    %273 = tpu.memref_slice %arg11[%c0_i32_121] : memref<3x!tpu.dma_semaphore, #tpu.memory_space<semaphore_mem>> -> memref<1x!tpu.dma_semaphore, #tpu.memory_space<semaphore_mem>>
    %274 = tpu.memref_squeeze %273 : memref<1x!tpu.dma_semaphore, #tpu.memory_space<semaphore_mem>> -> memref<!tpu.dma_semaphore, #tpu.memory_space<semaphore_mem>>
    tpu.wait_dma2 semaphore(%274 : memref<!tpu.dma_semaphore, #tpu.memory_space<semaphore_mem>>) src(%271 : memref<1x128xf32, #tpu.memory_space<any>>) dst(%272 : memref<1x128xf32, #tpu.memory_space<vmem>>)
    %c1_i32_125 = arith.constant 1 : i32
    %c0_i32_126 = arith.constant 0 : i32
    %c0_i32_127 = arith.constant 0 : i32
    %275 = tpu.memref_slice %arg5[%c0_i32_126, %c0_i32_127] : memref<64x128xf32, #tpu.memory_space<any>> -> memref<1x128xf32, #tpu.memory_space<any>>
    %c0_i32_128 = arith.constant 0 : i32
    %276 = tpu.memref_slice %arg9[%c3_i32_120, %c0_i32_128] : memref<8x128xf32, #tpu.memory_space<vmem>> -> memref<1x128xf32, #tpu.memory_space<vmem>>
    %277 = tpu.memref_slice %arg11[%c1_i32_125] : memref<3x!tpu.dma_semaphore, #tpu.memory_space<semaphore_mem>> -> memref<1x!tpu.dma_semaphore, #tpu.memory_space<semaphore_mem>>
    %278 = tpu.memref_squeeze %277 : memref<1x!tpu.dma_semaphore, #tpu.memory_space<semaphore_mem>> -> memref<!tpu.dma_semaphore, #tpu.memory_space<semaphore_mem>>
    tpu.wait_dma2 semaphore(%278 : memref<!tpu.dma_semaphore, #tpu.memory_space<semaphore_mem>>) src(%275 : memref<1x128xf32, #tpu.memory_space<any>>) dst(%276 : memref<1x128xf32, #tpu.memory_space<vmem>>)
    %c2_i32_129 = arith.constant 2 : i32
    %c0_i32_130 = arith.constant 0 : i32
    %c0_i32_131 = arith.constant 0 : i32
    %279 = tpu.memref_slice %arg5[%c0_i32_130, %c0_i32_131] : memref<64x128xf32, #tpu.memory_space<any>> -> memref<1x128xf32, #tpu.memory_space<any>>
    %c0_i32_132 = arith.constant 0 : i32
    %280 = tpu.memref_slice %arg10[%c3_i32_120, %c0_i32_132] : memref<8x128xf32, #tpu.memory_space<vmem>> -> memref<1x128xf32, #tpu.memory_space<vmem>>
    %281 = tpu.memref_slice %arg11[%c2_i32_129] : memref<3x!tpu.dma_semaphore, #tpu.memory_space<semaphore_mem>> -> memref<1x!tpu.dma_semaphore, #tpu.memory_space<semaphore_mem>>
    %282 = tpu.memref_squeeze %281 : memref<1x!tpu.dma_semaphore, #tpu.memory_space<semaphore_mem>> -> memref<!tpu.dma_semaphore, #tpu.memory_space<semaphore_mem>>
    tpu.wait_dma2 semaphore(%282 : memref<!tpu.dma_semaphore, #tpu.memory_space<semaphore_mem>>) src(%279 : memref<1x128xf32, #tpu.memory_space<any>>) dst(%280 : memref<1x128xf32, #tpu.memory_space<vmem>>)
    %c4_i32_133 = arith.constant 4 : i32
    %c0_i32_134 = arith.constant 0 : i32
    %c0_i32_135 = arith.constant 0 : i32
    %c0_i32_136 = arith.constant 0 : i32
    %283 = tpu.memref_slice %arg4[%c0_i32_135, %c0_i32_136] : memref<32x128xf32, #tpu.memory_space<any>> -> memref<1x128xf32, #tpu.memory_space<any>>
    %c0_i32_137 = arith.constant 0 : i32
    %284 = tpu.memref_slice %arg8[%c4_i32_133, %c0_i32_137] : memref<8x128xf32, #tpu.memory_space<vmem>> -> memref<1x128xf32, #tpu.memory_space<vmem>>
    %285 = tpu.memref_slice %arg11[%c0_i32_134] : memref<3x!tpu.dma_semaphore, #tpu.memory_space<semaphore_mem>> -> memref<1x!tpu.dma_semaphore, #tpu.memory_space<semaphore_mem>>
    %286 = tpu.memref_squeeze %285 : memref<1x!tpu.dma_semaphore, #tpu.memory_space<semaphore_mem>> -> memref<!tpu.dma_semaphore, #tpu.memory_space<semaphore_mem>>
    tpu.wait_dma2 semaphore(%286 : memref<!tpu.dma_semaphore, #tpu.memory_space<semaphore_mem>>) src(%283 : memref<1x128xf32, #tpu.memory_space<any>>) dst(%284 : memref<1x128xf32, #tpu.memory_space<vmem>>)
    %c1_i32_138 = arith.constant 1 : i32
    %c0_i32_139 = arith.constant 0 : i32
    %c0_i32_140 = arith.constant 0 : i32
    %287 = tpu.memref_slice %arg5[%c0_i32_139, %c0_i32_140] : memref<64x128xf32, #tpu.memory_space<any>> -> memref<1x128xf32, #tpu.memory_space<any>>
    %c0_i32_141 = arith.constant 0 : i32
    %288 = tpu.memref_slice %arg9[%c4_i32_133, %c0_i32_141] : memref<8x128xf32, #tpu.memory_space<vmem>> -> memref<1x128xf32, #tpu.memory_space<vmem>>
    %289 = tpu.memref_slice %arg11[%c1_i32_138] : memref<3x!tpu.dma_semaphore, #tpu.memory_space<semaphore_mem>> -> memref<1x!tpu.dma_semaphore, #tpu.memory_space<semaphore_mem>>
    %290 = tpu.memref_squeeze %289 : memref<1x!tpu.dma_semaphore, #tpu.memory_space<semaphore_mem>> -> memref<!tpu.dma_semaphore, #tpu.memory_space<semaphore_mem>>
    tpu.wait_dma2 semaphore(%290 : memref<!tpu.dma_semaphore, #tpu.memory_space<semaphore_mem>>) src(%287 : memref<1x128xf32, #tpu.memory_space<any>>) dst(%288 : memref<1x128xf32, #tpu.memory_space<vmem>>)
    %c2_i32_142 = arith.constant 2 : i32
    %c0_i32_143 = arith.constant 0 : i32
    %c0_i32_144 = arith.constant 0 : i32
    %291 = tpu.memref_slice %arg5[%c0_i32_143, %c0_i32_144] : memref<64x128xf32, #tpu.memory_space<any>> -> memref<1x128xf32, #tpu.memory_space<any>>
    %c0_i32_145 = arith.constant 0 : i32
    %292 = tpu.memref_slice %arg10[%c4_i32_133, %c0_i32_145] : memref<8x128xf32, #tpu.memory_space<vmem>> -> memref<1x128xf32, #tpu.memory_space<vmem>>
    %293 = tpu.memref_slice %arg11[%c2_i32_142] : memref<3x!tpu.dma_semaphore, #tpu.memory_space<semaphore_mem>> -> memref<1x!tpu.dma_semaphore, #tpu.memory_space<semaphore_mem>>
    %294 = tpu.memref_squeeze %293 : memref<1x!tpu.dma_semaphore, #tpu.memory_space<semaphore_mem>> -> memref<!tpu.dma_semaphore, #tpu.memory_space<semaphore_mem>>
    tpu.wait_dma2 semaphore(%294 : memref<!tpu.dma_semaphore, #tpu.memory_space<semaphore_mem>>) src(%291 : memref<1x128xf32, #tpu.memory_space<any>>) dst(%292 : memref<1x128xf32, #tpu.memory_space<vmem>>)
    %c5_i32_146 = arith.constant 5 : i32
    %c0_i32_147 = arith.constant 0 : i32
    %c0_i32_148 = arith.constant 0 : i32
    %c0_i32_149 = arith.constant 0 : i32
    %295 = tpu.memref_slice %arg4[%c0_i32_148, %c0_i32_149] : memref<32x128xf32, #tpu.memory_space<any>> -> memref<1x128xf32, #tpu.memory_space<any>>
    %c0_i32_150 = arith.constant 0 : i32
    %296 = tpu.memref_slice %arg8[%c5_i32_146, %c0_i32_150] : memref<8x128xf32, #tpu.memory_space<vmem>> -> memref<1x128xf32, #tpu.memory_space<vmem>>
    %297 = tpu.memref_slice %arg11[%c0_i32_147] : memref<3x!tpu.dma_semaphore, #tpu.memory_space<semaphore_mem>> -> memref<1x!tpu.dma_semaphore, #tpu.memory_space<semaphore_mem>>
    %298 = tpu.memref_squeeze %297 : memref<1x!tpu.dma_semaphore, #tpu.memory_space<semaphore_mem>> -> memref<!tpu.dma_semaphore, #tpu.memory_space<semaphore_mem>>
    tpu.wait_dma2 semaphore(%298 : memref<!tpu.dma_semaphore, #tpu.memory_space<semaphore_mem>>) src(%295 : memref<1x128xf32, #tpu.memory_space<any>>) dst(%296 : memref<1x128xf32, #tpu.memory_space<vmem>>)
    %c1_i32_151 = arith.constant 1 : i32
    %c0_i32_152 = arith.constant 0 : i32
    %c0_i32_153 = arith.constant 0 : i32
    %299 = tpu.memref_slice %arg5[%c0_i32_152, %c0_i32_153] : memref<64x128xf32, #tpu.memory_space<any>> -> memref<1x128xf32, #tpu.memory_space<any>>
    %c0_i32_154 = arith.constant 0 : i32
    %300 = tpu.memref_slice %arg9[%c5_i32_146, %c0_i32_154] : memref<8x128xf32, #tpu.memory_space<vmem>> -> memref<1x128xf32, #tpu.memory_space<vmem>>
    %301 = tpu.memref_slice %arg11[%c1_i32_151] : memref<3x!tpu.dma_semaphore, #tpu.memory_space<semaphore_mem>> -> memref<1x!tpu.dma_semaphore, #tpu.memory_space<semaphore_mem>>
    %302 = tpu.memref_squeeze %301 : memref<1x!tpu.dma_semaphore, #tpu.memory_space<semaphore_mem>> -> memref<!tpu.dma_semaphore, #tpu.memory_space<semaphore_mem>>
    tpu.wait_dma2 semaphore(%302 : memref<!tpu.dma_semaphore, #tpu.memory_space<semaphore_mem>>) src(%299 : memref<1x128xf32, #tpu.memory_space<any>>) dst(%300 : memref<1x128xf32, #tpu.memory_space<vmem>>)
    %c2_i32_155 = arith.constant 2 : i32
    %c0_i32_156 = arith.constant 0 : i32
    %c0_i32_157 = arith.constant 0 : i32
    %303 = tpu.memref_slice %arg5[%c0_i32_156, %c0_i32_157] : memref<64x128xf32, #tpu.memory_space<any>> -> memref<1x128xf32, #tpu.memory_space<any>>
    %c0_i32_158 = arith.constant 0 : i32
    %304 = tpu.memref_slice %arg10[%c5_i32_146, %c0_i32_158] : memref<8x128xf32, #tpu.memory_space<vmem>> -> memref<1x128xf32, #tpu.memory_space<vmem>>
    %305 = tpu.memref_slice %arg11[%c2_i32_155] : memref<3x!tpu.dma_semaphore, #tpu.memory_space<semaphore_mem>> -> memref<1x!tpu.dma_semaphore, #tpu.memory_space<semaphore_mem>>
    %306 = tpu.memref_squeeze %305 : memref<1x!tpu.dma_semaphore, #tpu.memory_space<semaphore_mem>> -> memref<!tpu.dma_semaphore, #tpu.memory_space<semaphore_mem>>
    tpu.wait_dma2 semaphore(%306 : memref<!tpu.dma_semaphore, #tpu.memory_space<semaphore_mem>>) src(%303 : memref<1x128xf32, #tpu.memory_space<any>>) dst(%304 : memref<1x128xf32, #tpu.memory_space<vmem>>)
    %c6_i32_159 = arith.constant 6 : i32
    %c0_i32_160 = arith.constant 0 : i32
    %c0_i32_161 = arith.constant 0 : i32
    %c0_i32_162 = arith.constant 0 : i32
    %307 = tpu.memref_slice %arg4[%c0_i32_161, %c0_i32_162] : memref<32x128xf32, #tpu.memory_space<any>> -> memref<1x128xf32, #tpu.memory_space<any>>
    %c0_i32_163 = arith.constant 0 : i32
    %308 = tpu.memref_slice %arg8[%c6_i32_159, %c0_i32_163] : memref<8x128xf32, #tpu.memory_space<vmem>> -> memref<1x128xf32, #tpu.memory_space<vmem>>
    %309 = tpu.memref_slice %arg11[%c0_i32_160] : memref<3x!tpu.dma_semaphore, #tpu.memory_space<semaphore_mem>> -> memref<1x!tpu.dma_semaphore, #tpu.memory_space<semaphore_mem>>
    %310 = tpu.memref_squeeze %309 : memref<1x!tpu.dma_semaphore, #tpu.memory_space<semaphore_mem>> -> memref<!tpu.dma_semaphore, #tpu.memory_space<semaphore_mem>>
    tpu.wait_dma2 semaphore(%310 : memref<!tpu.dma_semaphore, #tpu.memory_space<semaphore_mem>>) src(%307 : memref<1x128xf32, #tpu.memory_space<any>>) dst(%308 : memref<1x128xf32, #tpu.memory_space<vmem>>)
    %c1_i32_164 = arith.constant 1 : i32
    %c0_i32_165 = arith.constant 0 : i32
    %c0_i32_166 = arith.constant 0 : i32
    %311 = tpu.memref_slice %arg5[%c0_i32_165, %c0_i32_166] : memref<64x128xf32, #tpu.memory_space<any>> -> memref<1x128xf32, #tpu.memory_space<any>>
    %c0_i32_167 = arith.constant 0 : i32
    %312 = tpu.memref_slice %arg9[%c6_i32_159, %c0_i32_167] : memref<8x128xf32, #tpu.memory_space<vmem>> -> memref<1x128xf32, #tpu.memory_space<vmem>>
    %313 = tpu.memref_slice %arg11[%c1_i32_164] : memref<3x!tpu.dma_semaphore, #tpu.memory_space<semaphore_mem>> -> memref<1x!tpu.dma_semaphore, #tpu.memory_space<semaphore_mem>>
    %314 = tpu.memref_squeeze %313 : memref<1x!tpu.dma_semaphore, #tpu.memory_space<semaphore_mem>> -> memref<!tpu.dma_semaphore, #tpu.memory_space<semaphore_mem>>
    tpu.wait_dma2 semaphore(%314 : memref<!tpu.dma_semaphore, #tpu.memory_space<semaphore_mem>>) src(%311 : memref<1x128xf32, #tpu.memory_space<any>>) dst(%312 : memref<1x128xf32, #tpu.memory_space<vmem>>)
    %c2_i32_168 = arith.constant 2 : i32
    %c0_i32_169 = arith.constant 0 : i32
    %c0_i32_170 = arith.constant 0 : i32
    %315 = tpu.memref_slice %arg5[%c0_i32_169, %c0_i32_170] : memref<64x128xf32, #tpu.memory_space<any>> -> memref<1x128xf32, #tpu.memory_space<any>>
    %c0_i32_171 = arith.constant 0 : i32
    %316 = tpu.memref_slice %arg10[%c6_i32_159, %c0_i32_171] : memref<8x128xf32, #tpu.memory_space<vmem>> -> memref<1x128xf32, #tpu.memory_space<vmem>>
    %317 = tpu.memref_slice %arg11[%c2_i32_168] : memref<3x!tpu.dma_semaphore, #tpu.memory_space<semaphore_mem>> -> memref<1x!tpu.dma_semaphore, #tpu.memory_space<semaphore_mem>>
    %318 = tpu.memref_squeeze %317 : memref<1x!tpu.dma_semaphore, #tpu.memory_space<semaphore_mem>> -> memref<!tpu.dma_semaphore, #tpu.memory_space<semaphore_mem>>
    tpu.wait_dma2 semaphore(%318 : memref<!tpu.dma_semaphore, #tpu.memory_space<semaphore_mem>>) src(%315 : memref<1x128xf32, #tpu.memory_space<any>>) dst(%316 : memref<1x128xf32, #tpu.memory_space<vmem>>)
    %c7_i32_172 = arith.constant 7 : i32
    %c0_i32_173 = arith.constant 0 : i32
    %c0_i32_174 = arith.constant 0 : i32
    %c0_i32_175 = arith.constant 0 : i32
    %319 = tpu.memref_slice %arg4[%c0_i32_174, %c0_i32_175] : memref<32x128xf32, #tpu.memory_space<any>> -> memref<1x128xf32, #tpu.memory_space<any>>
    %c0_i32_176 = arith.constant 0 : i32
    %320 = tpu.memref_slice %arg8[%c7_i32_172, %c0_i32_176] : memref<8x128xf32, #tpu.memory_space<vmem>> -> memref<1x128xf32, #tpu.memory_space<vmem>>
    %321 = tpu.memref_slice %arg11[%c0_i32_173] : memref<3x!tpu.dma_semaphore, #tpu.memory_space<semaphore_mem>> -> memref<1x!tpu.dma_semaphore, #tpu.memory_space<semaphore_mem>>
    %322 = tpu.memref_squeeze %321 : memref<1x!tpu.dma_semaphore, #tpu.memory_space<semaphore_mem>> -> memref<!tpu.dma_semaphore, #tpu.memory_space<semaphore_mem>>
    tpu.wait_dma2 semaphore(%322 : memref<!tpu.dma_semaphore, #tpu.memory_space<semaphore_mem>>) src(%319 : memref<1x128xf32, #tpu.memory_space<any>>) dst(%320 : memref<1x128xf32, #tpu.memory_space<vmem>>)
    %c1_i32_177 = arith.constant 1 : i32
    %c0_i32_178 = arith.constant 0 : i32
    %c0_i32_179 = arith.constant 0 : i32
    %323 = tpu.memref_slice %arg5[%c0_i32_178, %c0_i32_179] : memref<64x128xf32, #tpu.memory_space<any>> -> memref<1x128xf32, #tpu.memory_space<any>>
    %c0_i32_180 = arith.constant 0 : i32
    %324 = tpu.memref_slice %arg9[%c7_i32_172, %c0_i32_180] : memref<8x128xf32, #tpu.memory_space<vmem>> -> memref<1x128xf32, #tpu.memory_space<vmem>>
    %325 = tpu.memref_slice %arg11[%c1_i32_177] : memref<3x!tpu.dma_semaphore, #tpu.memory_space<semaphore_mem>> -> memref<1x!tpu.dma_semaphore, #tpu.memory_space<semaphore_mem>>
    %326 = tpu.memref_squeeze %325 : memref<1x!tpu.dma_semaphore, #tpu.memory_space<semaphore_mem>> -> memref<!tpu.dma_semaphore, #tpu.memory_space<semaphore_mem>>
    tpu.wait_dma2 semaphore(%326 : memref<!tpu.dma_semaphore, #tpu.memory_space<semaphore_mem>>) src(%323 : memref<1x128xf32, #tpu.memory_space<any>>) dst(%324 : memref<1x128xf32, #tpu.memory_space<vmem>>)
    %c2_i32_181 = arith.constant 2 : i32
    %c0_i32_182 = arith.constant 0 : i32
    %c0_i32_183 = arith.constant 0 : i32
    %327 = tpu.memref_slice %arg5[%c0_i32_182, %c0_i32_183] : memref<64x128xf32, #tpu.memory_space<any>> -> memref<1x128xf32, #tpu.memory_space<any>>
    %c0_i32_184 = arith.constant 0 : i32
    %328 = tpu.memref_slice %arg10[%c7_i32_172, %c0_i32_184] : memref<8x128xf32, #tpu.memory_space<vmem>> -> memref<1x128xf32, #tpu.memory_space<vmem>>
    %329 = tpu.memref_slice %arg11[%c2_i32_181] : memref<3x!tpu.dma_semaphore, #tpu.memory_space<semaphore_mem>> -> memref<1x!tpu.dma_semaphore, #tpu.memory_space<semaphore_mem>>
    %330 = tpu.memref_squeeze %329 : memref<1x!tpu.dma_semaphore, #tpu.memory_space<semaphore_mem>> -> memref<!tpu.dma_semaphore, #tpu.memory_space<semaphore_mem>>
    tpu.wait_dma2 semaphore(%330 : memref<!tpu.dma_semaphore, #tpu.memory_space<semaphore_mem>>) src(%327 : memref<1x128xf32, #tpu.memory_space<any>>) dst(%328 : memref<1x128xf32, #tpu.memory_space<vmem>>)
    %c8_i32_185 = arith.constant 8 : i32
    %c0 = arith.constant 0 : index
    %c0_186 = arith.constant 0 : index
    %331 = vector.load %arg8[%c0, %c0_186] : memref<8x128xf32, #tpu.memory_space<vmem>>, vector<8x128xf32>
    %c0_187 = arith.constant 0 : index
    %c0_188 = arith.constant 0 : index
    %332 = vector.load %arg9[%c0_187, %c0_188] : memref<8x128xf32, #tpu.memory_space<vmem>>, vector<8x128xf32>
    %c0_189 = arith.constant 0 : index
    %c0_190 = arith.constant 0 : index
    %333 = vector.load %arg10[%c0_189, %c0_190] : memref<8x128xf32, #tpu.memory_space<vmem>>, vector<8x128xf32>
    %334 = arith.subf %332, %333 : vector<8x128xf32>
    %335 = arith.mulf %331, %334 : vector<8x128xf32>
    %cst_191 = arith.constant 1.000000e+00 : f32
    %336 = vector.broadcast %cst_191 : f32 to vector<1x128xf32>
    %cst_192 = arith.constant dense<0.000000e+00> : vector<1x8xf32>
    %337 = tpu.matmul %336, %335, %cst_192 {dimension_numbers = #tpu.dot_dimension_numbers<[1], [1], [0], [0], [0, 0, 1, 0], [], []>, precision = #tpu.contract_precision<fp32>} : vector<1x128xf32>, vector<8x128xf32>, vector<1x8xf32> -> vector<1x8xf32>
    %338 = arith.addf %337, %234 : vector<1x8xf32>
    %c0_193 = arith.constant 0 : index
    %c0_194 = arith.constant 0 : index
    %339 = vector.load %arg7[%c0_193, %c0_194] : memref<1x8xf32, #tpu.memory_space<vmem>>, vector<1x8xf32>
    tpu.vector_store %arg7[%c0_193, %c0_194], %338 {strides = array<i32>} : memref<1x8xf32, #tpu.memory_space<vmem>>, vector<1x8xf32>,
    return
  }
  func.func @transform_2(%arg0: i32, %arg1: memref<8xi32, #tpu.memory_space<smem>>, %arg2: memref<8xi32, #tpu.memory_space<smem>>, %arg3: memref<8xi32, #tpu.memory_space<smem>>) -> i32 {
    %c0_i32 = arith.constant 0 : i32
    %c0_i32_0 = arith.constant 0 : i32
    return %c0_i32 : i32
  }
  func.func @transform_3(%arg0: i32, %arg1: memref<8xi32, #tpu.memory_space<smem>>, %arg2: memref<8xi32, #tpu.memory_space<smem>>, %arg3: memref<8xi32, #tpu.memory_space<smem>>) -> (i32, i32) {
    %c0_i32 = arith.constant 0 : i32
    %c0_i32_0 = arith.constant 0 : i32
    return %c0_i32, %arg0 : i32, i32
  }
}

</mosaic_0001>

<llo_original>
// kernel: tpu_custom_call.1
$region0: #{tpu_custom_call.1}
  #allocation0 [shape = 'u32[]', space=smem, size = 0x4, offset = 0x4, fixed_abs, tag = 'smem constant byte address 0x4 - core index']
  #allocation1 [shape = 'u32[72,128]{1,0:T(1,128)}', space=vmem, size = 0x9000, scoped, tag = 'internal scratch']
  #allocation2 [shape = 'f32[8,128]{1,0:T(8,128)}', space=vmem, size = 0x1000, scoped, tag = 'scratch operand']
  #allocation3 [shape = 'f32[8,128]{1,0:T(8,128)}', space=vmem, size = 0x1000, scoped, tag = 'scratch operand']
  #allocation4 [shape = 'f32[8,128]{1,0:T(8,128)}', space=vmem, size = 0x1000, scoped, tag = 'scratch operand']
  #allocation5 [shape = 's32[3]{0}', space=sflag, size = 0xc, scoped, tag = 'scratch operand']
  #allocation6 [shape = 's32[1]{0}', space=sflag, size = 0x4, scoped, tag = 'scoped memory for tpu_custom_call.1']
  #allocation7 [shape = 'u8[512]{0}', space=smem, size = 0x200, scoped, tag = 'prefetched SMEM operand 0']
  #allocation8 [shape = 'u8[512]{0}', space=smem, size = 0x200, scoped, tag = 'prefetched SMEM operand 1']
  #allocation9 [shape = 'u8[512]{0}', space=smem, size = 0x200, scoped, tag = 'prefetched SMEM operand 2']
  #allocation14 [shape = 's32[]', space=sflag, size = 0x4, offset = 0, fixed_abs, tag = 'sflag constant byte address 0x0 - dummy sync flag']
  #allocation15 [shape = 's32[]', space=sflag, size = 0x4, offset = 0, fixed_abs, tag = 'sflag constant byte address 0x0 - dummy sync flag']
  #allocation16 [shape = 'u32[]', space=smem, size = 0x4, offset = 0x44, fixed_abs, tag = 'smem constant byte address 0x44 - assertion arg 0']
  #allocation17 [shape = 'u32[]', space=smem, size = 0x4, offset = 0x48, fixed_abs, tag = 'smem constant byte address 0x48 - assertion arg 1']
  #allocation18 [shape = 's32[]', space=sflag, size = 0x4, offset = 0, fixed_abs, tag = 'sflag constant byte address 0x0 - dummy sync flag']
  #allocation19 [shape = 's32[]', space=sflag, size = 0x4, offset = 0, fixed_abs, tag = 'sflag constant byte address 0x0 - dummy sync flag']
  #allocation20 [shape = 's32[]', space=sflag, size = 0x4, offset = 0, fixed_abs, tag = 'sflag constant byte address 0x0 - dummy sync flag']
  #allocation21 [shape = 's32[]', space=sflag, size = 0x4, offset = 0, fixed_abs, tag = 'sflag constant byte address 0x0 - dummy sync flag']
  #allocation22 [shape = 's32[]', space=sflag, size = 0x4, offset = 0, fixed_abs, tag = 'sflag constant byte address 0x0 - dummy sync flag']
  #allocation23 [shape = 's32[]', space=sflag, size = 0x4, offset = 0, fixed_abs, tag = 'sflag constant byte address 0x0 - dummy sync flag']
  #allocation24 [shape = 's32[]', space=sflag, size = 0x4, offset = 0, fixed_abs, tag = 'sflag constant byte address 0x0 - dummy sync flag']
  #allocation25 [shape = 's32[]', space=sflag, size = 0x4, offset = 0, fixed_abs, tag = 'sflag constant byte address 0x0 - dummy sync flag']
  #allocation26 [shape = 's32[]', space=sflag, size = 0x4, offset = 0, fixed_abs, tag = 'sflag constant byte address 0x0 - dummy sync flag']
  #allocation27 [shape = 's32[]', space=sflag, size = 0x4, offset = 0, fixed_abs, tag = 'sflag constant byte address 0x0 - dummy sync flag']
  #allocation28 [shape = 's32[]', space=sflag, size = 0x4, offset = 0, fixed_abs, tag = 'sflag constant byte address 0x0 - dummy sync flag']
  #allocation29 [shape = 's32[]', space=sflag, size = 0x4, offset = 0, fixed_abs, tag = 'sflag constant byte address 0x0 - dummy sync flag']
  #allocation30 [shape = 's32[]', space=sflag, size = 0x4, offset = 0, fixed_abs, tag = 'sflag constant byte address 0x0 - dummy sync flag']
  #allocation31 [shape = 's32[]', space=sflag, size = 0x4, offset = 0, fixed_abs, tag = 'sflag constant byte address 0x0 - dummy sync flag']
  #allocation32 [shape = 's32[]', space=sflag, size = 0x4, offset = 0, fixed_abs, tag = 'sflag constant byte address 0x0 - dummy sync flag']
  #allocation33 [shape = 's32[]', space=sflag, size = 0x4, offset = 0, fixed_abs, tag = 'sflag constant byte address 0x0 - dummy sync flag']
  #allocation34 [shape = 's32[]', space=sflag, size = 0x4, offset = 0, fixed_abs, tag = 'sflag constant byte address 0x0 - dummy sync flag']
  #allocation35 [shape = 's32[]', space=sflag, size = 0x4, offset = 0, fixed_abs, tag = 'sflag constant byte address 0x0 - dummy sync flag']
  #allocation36 [shape = 's32[]', space=sflag, size = 0x4, offset = 0, fixed_abs, tag = 'sflag constant byte address 0x0 - dummy sync flag']
  #allocation37 [shape = 's32[]', space=sflag, size = 0x4, offset = 0, fixed_abs, tag = 'sflag constant byte address 0x0 - dummy sync flag']
  #allocation38 [shape = 's32[]', space=sflag, size = 0x4, offset = 0, fixed_abs, tag = 'sflag constant byte address 0x0 - dummy sync flag']
  #allocation39 [shape = 's32[]', space=sflag, size = 0x4, offset = 0, fixed_abs, tag = 'sflag constant byte address 0x0 - dummy sync flag']
  #allocation40 [shape = 's32[]', space=sflag, size = 0x4, offset = 0, fixed_abs, tag = 'sflag constant byte address 0x0 - dummy sync flag']
  #allocation41 [shape = 's32[]', space=sflag, size = 0x4, offset = 0, fixed_abs, tag = 'sflag constant byte address 0x0 - dummy sync flag']
  #allocation42 [shape = 's32[]', space=sflag, size = 0x4, offset = 0, fixed_abs, tag = 'sflag constant byte address 0x0 - dummy sync flag']
  #allocation43 [shape = 's32[]', space=sflag, size = 0x4, offset = 0, fixed_abs, tag = 'sflag constant byte address 0x0 - dummy sync flag']
  #allocation44 [shape = 's32[]', space=sflag, size = 0x4, offset = 0, fixed_abs, tag = 'sflag constant byte address 0x0 - dummy sync flag']
  #allocation45 [shape = 's32[]', space=sflag, size = 0x4, offset = 0, fixed_abs, tag = 'sflag constant byte address 0x0 - dummy sync flag']
  #allocation46 [shape = 's32[]', space=sflag, size = 0x4, offset = 0, fixed_abs, tag = 'sflag constant byte address 0x0 - dummy sync flag']
  #allocation47 [shape = 's32[]', space=sflag, size = 0x4, offset = 0, fixed_abs, tag = 'sflag constant byte address 0x0 - dummy sync flag']
  #allocation48 [shape = 's32[]', space=sflag, size = 0x4, offset = 0, fixed_abs, tag = 'sflag constant byte address 0x0 - dummy sync flag']
  #allocation49 [shape = 's32[]', space=sflag, size = 0x4, offset = 0, fixed_abs, tag = 'sflag constant byte address 0x0 - dummy sync flag']
  #allocation50 [shape = 's32[]', space=sflag, size = 0x4, offset = 0, fixed_abs, tag = 'sflag constant byte address 0x0 - dummy sync flag']
  #allocation51 [shape = 's32[]', space=sflag, size = 0x4, offset = 0, fixed_abs, tag = 'sflag constant byte address 0x0 - dummy sync flag']
  #allocation52 [shape = 's32[]', space=sflag, size = 0x4, offset = 0, fixed_abs, tag = 'sflag constant byte address 0x0 - dummy sync flag']
  #allocation53 [shape = 's32[]', space=sflag, size = 0x4, offset = 0, fixed_abs, tag = 'sflag constant byte address 0x0 - dummy sync flag']
  #allocation54 [shape = 's32[]', space=sflag, size = 0x4, offset = 0, fixed_abs, tag = 'sflag constant byte address 0x0 - dummy sync flag']
  #allocation55 [shape = 's32[]', space=sflag, size = 0x4, offset = 0, fixed_abs, tag = 'sflag constant byte address 0x0 - dummy sync flag']
  #allocation56 [shape = 's32[]', space=sflag, size = 0x4, offset = 0, fixed_abs, tag = 'sflag constant byte address 0x0 - dummy sync flag']
  #allocation57 [shape = 's32[]', space=sflag, size = 0x4, offset = 0, fixed_abs, tag = 'sflag constant byte address 0x0 - dummy sync flag']
  #allocation58 [shape = 's32[]', space=sflag, size = 0x4, offset = 0, fixed_abs, tag = 'sflag constant byte address 0x0 - dummy sync flag']
  #allocation59 [shape = 's32[]', space=sflag, size = 0x4, offset = 0, fixed_abs, tag = 'sflag constant byte address 0x0 - dummy sync flag']
  #allocation60 [shape = 's32[]', space=sflag, size = 0x4, offset = 0, fixed_abs, tag = 'sflag constant byte address 0x0 - dummy sync flag']
  #allocation61 [shape = 's32[]', space=sflag, size = 0x4, offset = 0, fixed_abs, tag = 'sflag constant byte address 0x0 - dummy sync flag']
  #allocation62 [shape = 's32[]', space=sflag, size = 0x4, offset = 0, fixed_abs, tag = 'sflag constant byte address 0x0 - dummy sync flag']
  #allocation63 [shape = 's32[]', space=sflag, size = 0x4, offset = 0, fixed_abs, tag = 'sflag constant byte address 0x0 - dummy sync flag']
  %s0 = inlined_call_operand.hbm [shape: s32[8], index: 0, kind: input, shape index: {}]
  %s1 = inlined_call_operand.hbm [shape: s32[8], index: 1, kind: input, shape index: {}]
  %s2 = inlined_call_operand.vmem [shape: s32[8], index: 2, kind: input, shape index: {}]
  %s3 = inlined_call_operand.hbm [shape: f32[32,128], index: 3, kind: input, shape index: {}]
  %s4 = inlined_call_operand.hbm [shape: f32[64,128], index: 4, kind: input, shape index: {}]
  %s5 = inlined_call_operand.vmem [shape: f32[64], index: 5, kind: input, shape index: {}]
  %s6 = inlined_call_operand.hbm [shape: f32[1,8], index: 6, kind: output, shape index: {}]
  %s7 = sld [smem:[#allocation0]]
  $region114: #{tpu_custom_call.1} parent=0
    _
  %s9 = ssub.s32 1, %s7
  %s10 = scalar_select 0, %s9, %s7
  %s12 = sshll.u32 %s0, 4
  %s13 = int_to_ptr.hbm [resolvable:$true] %s12
  %15 = dma.hbm_to_smem %s13, 16, [#allocation7], [#allocation6]
  %s17 = sshll.u32 %s1, 4
  %s18 = int_to_ptr.hbm [resolvable:$true] %s17
  %20 = dma.hbm_to_smem %s18, 16, [#allocation8], [#allocation6]
  %s22 = sshll.u32 %s2, 4
  %s23 = int_to_ptr.vmem [resolvable:$true] %s22
  %25 = dma.vmem_to_smem %s23, 16, [#allocation9], [#allocation6]
  %27 = dma.done [#allocation6], 48
  %28 = sfence
  $region1: #{tpu_custom_call.1} parent=0
    #allocation10 [shape = 'u8[512]{0}', space=smem, size = 0x200, scoped, tag = 'input window, operand 5, single buffered']
    #allocation11 [shape = 's32[1]{0}', space=sflag, size = 0x4, scoped, tag = 'scoped memory for tpu_custom_call.1']
    #allocation12 [shape = 's32[1]{0}', space=sflag, size = 0x4, scoped, tag = 'scoped memory for tpu_custom_call.1']
    #allocation13 [shape = 'u8[512]{0}', space=vmem, size = 0x400, scoped, tag = 'output window, operand 0, single buffered']
    %29 = vsyncpa [#allocation12], 0
    %30 = vsyncpa [#allocation11], 0
    // Predicated region
    $region2: #{tpu_custom_call.1} parent=1 // pred_check
      _
    $region3: #{tpu_custom_call.1} parent=1 // pred_check_branch
      %32 = sbr.rel (0) target = $region5
    $region4: #{tpu_custom_call.1} parent=1 // pred_region
      %34 = vsyncadd [#allocation12], 0
      %s36 = sshll.u32 %s5, 4
      %s37 = int_to_ptr.vmem [resolvable:$true] %s36
      %39 = dma.vmem_to_smem %s37, 16, [#allocation10], [#allocation12]
    $region5: #{tpu_custom_call.1} parent=1 // pred_fallthru
      _
    // Predicated region
    $region6: #{tpu_custom_call.1} parent=1 // pred_check
      _
    $region7: #{tpu_custom_call.1} parent=1 // pred_check_branch
      %41 = sbr.rel (0) target = $region9
    $region8: #{tpu_custom_call.1} parent=1 // pred_region
      %43 = dma.done [#allocation12], 16
    $region9: #{tpu_custom_call.1} parent=1 // pred_fallthru
      _
    %44 = sfence
    %s45 = smul.u32 0, 8
    %v46 = vlaneseq
    %v47 = vand.u32 %v46, 127
    %p48 = scmp.lt.s32.totalorder %s45, 7
    %s49 = scalar_select %p48, %s45, 7
    %s50 = sld [smem:[#allocation7 + %s49]]
    %s51 = sld [smem:[#allocation8 + %s49]]
    %s52 = sld [smem:[#allocation9 + %s49]]
    %s53 = scalar_lea.hbm %s3, %s50
    // Predicated region
    $region10: #{tpu_custom_call.1} parent=1 // pred_check
      _
    $region11: #{tpu_custom_call.1} parent=1 // pred_check_branch
      %55 = sbr.rel target = $region13
    $region12: #{tpu_custom_call.1} parent=1 // pred_region
      %56 = sst [smem:[#allocation16]] [#allocation15]
      %57 = sst [smem:[#allocation17]] [#allocation14]
    $region13: #{tpu_custom_call.1} parent=1 // pred_fallthru
      _
    %59 = shalt.err (0)
    %s61 = sshll.u32 %s53, 4
    %s62 = int_to_ptr.hbm [resolvable:$true] %s61
    %s63 = sshll.u32 [#allocation2], 4
    %s64 = int_to_ptr.vmem [resolvable:$true] %s63
    %66 = dma.hbm_to_vmem [thread:$0]  %s62, 16, %s64, [#allocation5]
    %s67 = scalar_lea.hbm %s4, %s51
    %s68 = scalar_lea.sflag [#allocation5], 1
    // Predicated region
    $region14: #{tpu_custom_call.1} parent=1 // pred_check
      _
    $region15: #{tpu_custom_call.1} parent=1 // pred_check_branch
      %70 = sbr.rel target = $region17
    $region16: #{tpu_custom_call.1} parent=1 // pred_region
      %71 = sst [smem:[#allocation16]] [#allocation19]
      %72 = sst [smem:[#allocation17]] [#allocation18]
    $region17: #{tpu_custom_call.1} parent=1 // pred_fallthru
      _
    %74 = shalt.err (0)
    %s76 = sshll.u32 %s67, 4
    %s77 = int_to_ptr.hbm [resolvable:$true] %s76
    %s78 = sshll.u32 [#allocation3], 4
    %s79 = int_to_ptr.vmem [resolvable:$true] %s78
    %81 = dma.hbm_to_vmem [thread:$0]  %s77, 16, %s79, %s68
    %s82 = scalar_lea.hbm %s4, %s52
    %s83 = scalar_lea.sflag [#allocation5], 2
    // Predicated region
    $region18: #{tpu_custom_call.1} parent=1 // pred_check
      _
    $region19: #{tpu_custom_call.1} parent=1 // pred_check_branch
      %85 = sbr.rel target = $region21
    $region20: #{tpu_custom_call.1} parent=1 // pred_region
      %86 = sst [smem:[#allocation16]] [#allocation21]
      %87 = sst [smem:[#allocation17]] [#allocation20]
    $region21: #{tpu_custom_call.1} parent=1 // pred_fallthru
      _
    %89 = shalt.err (0)
    %s91 = sshll.u32 %s82, 4
    %s92 = int_to_ptr.hbm [resolvable:$true] %s91
    %s93 = sshll.u32 [#allocation4], 4
    %s94 = int_to_ptr.vmem [resolvable:$true] %s93
    %96 = dma.hbm_to_vmem [thread:$0]  %s92, 16, %s94, %s83
    %s97 = sld [smem:[#allocation10 + %s51]]
    %s98 = sld [smem:[#allocation10 + %s52]]
    %s99 = ssub.f32 %s97, %s98
    %vm100 = vcmp.eq.s32.totalorder %v47, 0
    %v101 = vstv %s99
    %v102 = vsel %vm100, %v101, 0.0
    %s103 = sadd.s32 %s45, 1
    %p104 = scmp.lt.s32.totalorder %s103, 7
    %s105 = scalar_select %p104, %s103, 7
    %s106 = sld [smem:[#allocation7 + %s105]]
    %s107 = sld [smem:[#allocation8 + %s105]]
    %s108 = sld [smem:[#allocation9 + %s105]]
    %s109 = scalar_lea.hbm %s3, %s106
    %s110 = scalar_lea.vmem [#allocation2], 1
    // Predicated region
    $region22: #{tpu_custom_call.1} parent=1 // pred_check
      _
    $region23: #{tpu_custom_call.1} parent=1 // pred_check_branch
      %112 = sbr.rel target = $region25
    $region24: #{tpu_custom_call.1} parent=1 // pred_region
      %113 = sst [smem:[#allocation16]] [#allocation23]
      %114 = sst [smem:[#allocation17]] [#allocation22]
    $region25: #{tpu_custom_call.1} parent=1 // pred_fallthru
      _
    %116 = shalt.err (0)
    %s118 = sshll.u32 %s109, 4
    %s119 = int_to_ptr.hbm [resolvable:$true] %s118
    %s120 = sshll.u32 %s110, 4
    %s121 = int_to_ptr.vmem [resolvable:$true] %s120
    %123 = dma.hbm_to_vmem [thread:$0]  %s119, 16, %s121, [#allocation5]
    %s124 = scalar_lea.hbm %s4, %s107
    %s125 = scalar_lea.vmem [#allocation3], 1
    // Predicated region
    $region26: #{tpu_custom_call.1} parent=1 // pred_check
      _
    $region27: #{tpu_custom_call.1} parent=1 // pred_check_branch
      %127 = sbr.rel target = $region29
    $region28: #{tpu_custom_call.1} parent=1 // pred_region
      %128 = sst [smem:[#allocation16]] [#allocation25]
      %129 = sst [smem:[#allocation17]] [#allocation24]
    $region29: #{tpu_custom_call.1} parent=1 // pred_fallthru
      _
    %131 = shalt.err (0)
    %s133 = sshll.u32 %s124, 4
    %s134 = int_to_ptr.hbm [resolvable:$true] %s133
    %s135 = sshll.u32 %s125, 4
    %s136 = int_to_ptr.vmem [resolvable:$true] %s135
    %138 = dma.hbm_to_vmem [thread:$0]  %s134, 16, %s136, %s68
    %s139 = scalar_lea.hbm %s4, %s108
    %s140 = scalar_lea.vmem [#allocation4], 1
    // Predicated region
    $region30: #{tpu_custom_call.1} parent=1 // pred_check
      _
    $region31: #{tpu_custom_call.1} parent=1 // pred_check_branch
      %142 = sbr.rel target = $region33
    $region32: #{tpu_custom_call.1} parent=1 // pred_region
      %143 = sst [smem:[#allocation16]] [#allocation27]
      %144 = sst [smem:[#allocation17]] [#allocation26]
    $region33: #{tpu_custom_call.1} parent=1 // pred_fallthru
      _
    %146 = shalt.err (0)
    %s148 = sshll.u32 %s139, 4
    %s149 = int_to_ptr.hbm [resolvable:$true] %s148
    %s150 = sshll.u32 %s140, 4
    %s151 = int_to_ptr.vmem [resolvable:$true] %s150
    %153 = dma.hbm_to_vmem [thread:$0]  %s149, 16, %s151, %s83
    %s154 = sld [smem:[#allocation10 + %s107]]
    %s155 = sld [smem:[#allocation10 + %s108]]
    %s156 = ssub.f32 %s154, %s155
    %vm157 = vcmp.eq.s32.totalorder %v47, 1
    %v158 = vstv %s156
    %v159 = vsel %vm157, %v158, %v102
    %s160 = sadd.s32 %s45, 2
    %p161 = scmp.lt.s32.totalorder %s160, 7
    %s162 = scalar_select %p161, %s160, 7
    %s163 = sld [smem:[#allocation7 + %s162]]
    %s164 = sld [smem:[#allocation8 + %s162]]
    %s165 = sld [smem:[#allocation9 + %s162]]
    %s166 = scalar_lea.hbm %s3, %s163
    %s167 = scalar_lea.vmem [#allocation2], 2
    // Predicated region
    $region34: #{tpu_custom_call.1} parent=1 // pred_check
      _
    $region35: #{tpu_custom_call.1} parent=1 // pred_check_branch
      %169 = sbr.rel target = $region37
    $region36: #{tpu_custom_call.1} parent=1 // pred_region
      %170 = sst [smem:[#allocation16]] [#allocation29]
      %171 = sst [smem:[#allocation17]] [#allocation28]
    $region37: #{tpu_custom_call.1} parent=1 // pred_fallthru
      _
    %173 = shalt.err (0)
    %s175 = sshll.u32 %s166, 4
    %s176 = int_to_ptr.hbm [resolvable:$true] %s175
    %s177 = sshll.u32 %s167, 4
    %s178 = int_to_ptr.vmem [resolvable:$true] %s177
    %180 = dma.hbm_to_vmem [thread:$0]  %s176, 16, %s178, [#allocation5]
    %s181 = scalar_lea.hbm %s4, %s164
    %s182 = scalar_lea.vmem [#allocation3], 2
    // Predicated region
    $region38: #{tpu_custom_call.1} parent=1 // pred_check
      _
    $region39: #{tpu_custom_call.1} parent=1 // pred_check_branch
      %184 = sbr.rel target = $region41
    $region40: #{tpu_custom_call.1} parent=1 // pred_region
      %185 = sst [smem:[#allocation16]] [#allocation31]
      %186 = sst [smem:[#allocation17]] [#allocation30]
    $region41: #{tpu_custom_call.1} parent=1 // pred_fallthru
      _
    %188 = shalt.err (0)
    %s190 = sshll.u32 %s181, 4
    %s191 = int_to_ptr.hbm [resolvable:$true] %s190
    %s192 = sshll.u32 %s182, 4
    %s193 = int_to_ptr.vmem [resolvable:$true] %s192
    %195 = dma.hbm_to_vmem [thread:$0]  %s191, 16, %s193, %s68
    %s196 = scalar_lea.hbm %s4, %s165
    %s197 = scalar_lea.vmem [#allocation4], 2
    // Predicated region
    $region42: #{tpu_custom_call.1} parent=1 // pred_check
      _
    $region43: #{tpu_custom_call.1} parent=1 // pred_check_branch
      %199 = sbr.rel target = $region45
    $region44: #{tpu_custom_call.1} parent=1 // pred_region
      %200 = sst [smem:[#allocation16]] [#allocation33]
      %201 = sst [smem:[#allocation17]] [#allocation32]
    $region45: #{tpu_custom_call.1} parent=1 // pred_fallthru
      _
    %203 = shalt.err (0)
    %s205 = sshll.u32 %s196, 4
    %s206 = int_to_ptr.hbm [resolvable:$true] %s205
    %s207 = sshll.u32 %s197, 4
    %s208 = int_to_ptr.vmem [resolvable:$true] %s207
    %210 = dma.hbm_to_vmem [thread:$0]  %s206, 16, %s208, %s83
    %s211 = sld [smem:[#allocation10 + %s164]]
    %s212 = sld [smem:[#allocation10 + %s165]]
    %s213 = ssub.f32 %s211, %s212
    %vm214 = vcmp.eq.s32.totalorder %v47, 2
    %v215 = vstv %s213
    %v216 = vsel %vm214, %v215, %v159
    %s217 = sadd.s32 %s45, 3
    %p218 = scmp.lt.s32.totalorder %s217, 7
    %s219 = scalar_select %p218, %s217, 7
    %s220 = sld [smem:[#allocation7 + %s219]]
    %s221 = sld [smem:[#allocation8 + %s219]]
    %s222 = sld [smem:[#allocation9 + %s219]]
    %s223 = scalar_lea.hbm %s3, %s220
    %s224 = scalar_lea.vmem [#allocation2], 3
    // Predicated region
    $region46: #{tpu_custom_call.1} parent=1 // pred_check
      _
    $region47: #{tpu_custom_call.1} parent=1 // pred_check_branch
      %226 = sbr.rel target = $region49
    $region48: #{tpu_custom_call.1} parent=1 // pred_region
      %227 = sst [smem:[#allocation16]] [#allocation35]
      %228 = sst [smem:[#allocation17]] [#allocation34]
    $region49: #{tpu_custom_call.1} parent=1 // pred_fallthru
      _
    %230 = shalt.err (0)
    %s232 = sshll.u32 %s223, 4
    %s233 = int_to_ptr.hbm [resolvable:$true] %s232
    %s234 = sshll.u32 %s224, 4
    %s235 = int_to_ptr.vmem [resolvable:$true] %s234
    %237 = dma.hbm_to_vmem [thread:$0]  %s233, 16, %s235, [#allocation5]
    %s238 = scalar_lea.hbm %s4, %s221
    %s239 = scalar_lea.vmem [#allocation3], 3
    // Predicated region
    $region50: #{tpu_custom_call.1} parent=1 // pred_check
      _
    $region51: #{tpu_custom_call.1} parent=1 // pred_check_branch
      %241 = sbr.rel target = $region53
    $region52: #{tpu_custom_call.1} parent=1 // pred_region
      %242 = sst [smem:[#allocation16]] [#allocation37]
      %243 = sst [smem:[#allocation17]] [#allocation36]
    $region53: #{tpu_custom_call.1} parent=1 // pred_fallthru
      _
    %245 = shalt.err (0)
    %s247 = sshll.u32 %s238, 4
    %s248 = int_to_ptr.hbm [resolvable:$true] %s247
    %s249 = sshll.u32 %s239, 4
    %s250 = int_to_ptr.vmem [resolvable:$true] %s249
    %252 = dma.hbm_to_vmem [thread:$0]  %s248, 16, %s250, %s68
    %s253 = scalar_lea.hbm %s4, %s222
    %s254 = scalar_lea.vmem [#allocation4], 3
    // Predicated region
    $region54: #{tpu_custom_call.1} parent=1 // pred_check
      _
    $region55: #{tpu_custom_call.1} parent=1 // pred_check_branch
      %256 = sbr.rel target = $region57
    $region56: #{tpu_custom_call.1} parent=1 // pred_region
      %257 = sst [smem:[#allocation16]] [#allocation39]
      %258 = sst [smem:[#allocation17]] [#allocation38]
    $region57: #{tpu_custom_call.1} parent=1 // pred_fallthru
      _
    %260 = shalt.err (0)
    %s262 = sshll.u32 %s253, 4
    %s263 = int_to_ptr.hbm [resolvable:$true] %s262
    %s264 = sshll.u32 %s254, 4
    %s265 = int_to_ptr.vmem [resolvable:$true] %s264
    %267 = dma.hbm_to_vmem [thread:$0]  %s263, 16, %s265, %s83
    %s268 = sld [smem:[#allocation10 + %s221]]
    %s269 = sld [smem:[#allocation10 + %s222]]
    %s270 = ssub.f32 %s268, %s269
    %vm271 = vcmp.eq.s32.totalorder %v47, 3
    %v272 = vstv %s270
    %v273 = vsel %vm271, %v272, %v216
    %s274 = sadd.s32 %s45, 4
    %p275 = scmp.lt.s32.totalorder %s274, 7
    %s276 = scalar_select %p275, %s274, 7
    %s277 = sld [smem:[#allocation7 + %s276]]
    %s278 = sld [smem:[#allocation8 + %s276]]
    %s279 = sld [smem:[#allocation9 + %s276]]
    %s280 = scalar_lea.hbm %s3, %s277
    %s281 = scalar_lea.vmem [#allocation2], 4
    // Predicated region
    $region58: #{tpu_custom_call.1} parent=1 // pred_check
      _
    $region59: #{tpu_custom_call.1} parent=1 // pred_check_branch
      %283 = sbr.rel target = $region61
    $region60: #{tpu_custom_call.1} parent=1 // pred_region
      %284 = sst [smem:[#allocation16]] [#allocation41]
      %285 = sst [smem:[#allocation17]] [#allocation40]
    $region61: #{tpu_custom_call.1} parent=1 // pred_fallthru
      _
    %287 = shalt.err (0)
    %s289 = sshll.u32 %s280, 4
    %s290 = int_to_ptr.hbm [resolvable:$true] %s289
    %s291 = sshll.u32 %s281, 4
    %s292 = int_to_ptr.vmem [resolvable:$true] %s291
    %294 = dma.hbm_to_vmem [thread:$0]  %s290, 16, %s292, [#allocation5]
    %s295 = scalar_lea.hbm %s4, %s278
    %s296 = scalar_lea.vmem [#allocation3], 4
    // Predicated region
    $region62: #{tpu_custom_call.1} parent=1 // pred_check
      _
    $region63: #{tpu_custom_call.1} parent=1 // pred_check_branch
      %298 = sbr.rel target = $region65
    $region64: #{tpu_custom_call.1} parent=1 // pred_region
      %299 = sst [smem:[#allocation16]] [#allocation43]
      %300 = sst [smem:[#allocation17]] [#allocation42]
    $region65: #{tpu_custom_call.1} parent=1 // pred_fallthru
      _
    %302 = shalt.err (0)
    %s304 = sshll.u32 %s295, 4
    %s305 = int_to_ptr.hbm [resolvable:$true] %s304
    %s306 = sshll.u32 %s296, 4
    %s307 = int_to_ptr.vmem [resolvable:$true] %s306
    %309 = dma.hbm_to_vmem [thread:$0]  %s305, 16, %s307, %s68
    %s310 = scalar_lea.hbm %s4, %s279
    %s311 = scalar_lea.vmem [#allocation4], 4
    // Predicated region
    $region66: #{tpu_custom_call.1} parent=1 // pred_check
      _
    $region67: #{tpu_custom_call.1} parent=1 // pred_check_branch
      %313 = sbr.rel target = $region69
    $region68: #{tpu_custom_call.1} parent=1 // pred_region
      %314 = sst [smem:[#allocation16]] [#allocation45]
      %315 = sst [smem:[#allocation17]] [#allocation44]
    $region69: #{tpu_custom_call.1} parent=1 // pred_fallthru
      _
    %317 = shalt.err (0)
    %s319 = sshll.u32 %s310, 4
    %s320 = int_to_ptr.hbm [resolvable:$true] %s319
    %s321 = sshll.u32 %s311, 4
    %s322 = int_to_ptr.vmem [resolvable:$true] %s321
    %324 = dma.hbm_to_vmem [thread:$0]  %s320, 16, %s322, %s83
    %s325 = sld [smem:[#allocation10 + %s278]]
    %s326 = sld [smem:[#allocation10 + %s279]]
    %s327 = ssub.f32 %s325, %s326
    %vm328 = vcmp.eq.s32.totalorder %v47, 4
    %v329 = vstv %s327
    %v330 = vsel %vm328, %v329, %v273
    %s331 = sadd.s32 %s45, 5
    %p332 = scmp.lt.s32.totalorder %s331, 7
    %s333 = scalar_select %p332, %s331, 7
    %s334 = sld [smem:[#allocation7 + %s333]]
    %s335 = sld [smem:[#allocation8 + %s333]]
    %s336 = sld [smem:[#allocation9 + %s333]]
    %s337 = scalar_lea.hbm %s3, %s334
    %s338 = scalar_lea.vmem [#allocation2], 5
    // Predicated region
    $region70: #{tpu_custom_call.1} parent=1 // pred_check
      _
    $region71: #{tpu_custom_call.1} parent=1 // pred_check_branch
      %340 = sbr.rel target = $region73
    $region72: #{tpu_custom_call.1} parent=1 // pred_region
      %341 = sst [smem:[#allocation16]] [#allocation47]
      %342 = sst [smem:[#allocation17]] [#allocation46]
    $region73: #{tpu_custom_call.1} parent=1 // pred_fallthru
      _
    %344 = shalt.err (0)
    %s346 = sshll.u32 %s337, 4
    %s347 = int_to_ptr.hbm [resolvable:$true] %s346
    %s348 = sshll.u32 %s338, 4
    %s349 = int_to_ptr.vmem [resolvable:$true] %s348
    %351 = dma.hbm_to_vmem [thread:$0]  %s347, 16, %s349, [#allocation5]
    %s352 = scalar_lea.hbm %s4, %s335
    %s353 = scalar_lea.vmem [#allocation3], 5
    // Predicated region
    $region74: #{tpu_custom_call.1} parent=1 // pred_check
      _
    $region75: #{tpu_custom_call.1} parent=1 // pred_check_branch
      %355 = sbr.rel target = $region77
    $region76: #{tpu_custom_call.1} parent=1 // pred_region
      %356 = sst [smem:[#allocation16]] [#allocation49]
      %357 = sst [smem:[#allocation17]] [#allocation48]
    $region77: #{tpu_custom_call.1} parent=1 // pred_fallthru
      _
    %359 = shalt.err (0)
    %s361 = sshll.u32 %s352, 4
    %s362 = int_to_ptr.hbm [resolvable:$true] %s361
    %s363 = sshll.u32 %s353, 4
    %s364 = int_to_ptr.vmem [resolvable:$true] %s363
    %366 = dma.hbm_to_vmem [thread:$0]  %s362, 16, %s364, %s68
    %s367 = scalar_lea.hbm %s4, %s336
    %s368 = scalar_lea.vmem [#allocation4], 5
    // Predicated region
    $region78: #{tpu_custom_call.1} parent=1 // pred_check
      _
    $region79: #{tpu_custom_call.1} parent=1 // pred_check_branch
      %370 = sbr.rel target = $region81
    $region80: #{tpu_custom_call.1} parent=1 // pred_region
      %371 = sst [smem:[#allocation16]] [#allocation51]
      %372 = sst [smem:[#allocation17]] [#allocation50]
    $region81: #{tpu_custom_call.1} parent=1 // pred_fallthru
      _
    %374 = shalt.err (0)
    %s376 = sshll.u32 %s367, 4
    %s377 = int_to_ptr.hbm [resolvable:$true] %s376
    %s378 = sshll.u32 %s368, 4
    %s379 = int_to_ptr.vmem [resolvable:$true] %s378
    %381 = dma.hbm_to_vmem [thread:$0]  %s377, 16, %s379, %s83
    %s382 = sld [smem:[#allocation10 + %s335]]
    %s383 = sld [smem:[#allocation10 + %s336]]
    %s384 = ssub.f32 %s382, %s383
    %vm385 = vcmp.eq.s32.totalorder %v47, 5
    %v386 = vstv %s384
    %v387 = vsel %vm385, %v386, %v330
    %s388 = sadd.s32 %s45, 6
    %p389 = scmp.lt.s32.totalorder %s388, 7
    %s390 = scalar_select %p389, %s388, 7
    %s391 = sld [smem:[#allocation7 + %s390]]
    %s392 = sld [smem:[#allocation8 + %s390]]
    %s393 = sld [smem:[#allocation9 + %s390]]
    %s394 = scalar_lea.hbm %s3, %s391
    %s395 = scalar_lea.vmem [#allocation2], 6
    // Predicated region
    $region82: #{tpu_custom_call.1} parent=1 // pred_check
      _
    $region83: #{tpu_custom_call.1} parent=1 // pred_check_branch
      %397 = sbr.rel target = $region85
    $region84: #{tpu_custom_call.1} parent=1 // pred_region
      %398 = sst [smem:[#allocation16]] [#allocation53]
      %399 = sst [smem:[#allocation17]] [#allocation52]
    $region85: #{tpu_custom_call.1} parent=1 // pred_fallthru
      _
    %401 = shalt.err (0)
    %s403 = sshll.u32 %s394, 4
    %s404 = int_to_ptr.hbm [resolvable:$true] %s403
    %s405 = sshll.u32 %s395, 4
    %s406 = int_to_ptr.vmem [resolvable:$true] %s405
    %408 = dma.hbm_to_vmem [thread:$0]  %s404, 16, %s406, [#allocation5]
    %s409 = scalar_lea.hbm %s4, %s392
    %s410 = scalar_lea.vmem [#allocation3], 6
    // Predicated region
    $region86: #{tpu_custom_call.1} parent=1 // pred_check
      _
    $region87: #{tpu_custom_call.1} parent=1 // pred_check_branch
      %412 = sbr.rel target = $region89
    $region88: #{tpu_custom_call.1} parent=1 // pred_region
      %413 = sst [smem:[#allocation16]] [#allocation55]
      %414 = sst [smem:[#allocation17]] [#allocation54]
    $region89: #{tpu_custom_call.1} parent=1 // pred_fallthru
      _
    %416 = shalt.err (0)
    %s418 = sshll.u32 %s409, 4
    %s419 = int_to_ptr.hbm [resolvable:$true] %s418
    %s420 = sshll.u32 %s410, 4
    %s421 = int_to_ptr.vmem [resolvable:$true] %s420
    %423 = dma.hbm_to_vmem [thread:$0]  %s419, 16, %s421, %s68
    %s424 = scalar_lea.hbm %s4, %s393
    %s425 = scalar_lea.vmem [#allocation4], 6
    // Predicated region
    $region90: #{tpu_custom_call.1} parent=1 // pred_check
      _
    $region91: #{tpu_custom_call.1} parent=1 // pred_check_branch
      %427 = sbr.rel target = $region93
    $region92: #{tpu_custom_call.1} parent=1 // pred_region
      %428 = sst [smem:[#allocation16]] [#allocation57]
      %429 = sst [smem:[#allocation17]] [#allocation56]
    $region93: #{tpu_custom_call.1} parent=1 // pred_fallthru
      _
    %431 = shalt.err (0)
    %s433 = sshll.u32 %s424, 4
    %s434 = int_to_ptr.hbm [resolvable:$true] %s433
    %s435 = sshll.u32 %s425, 4
    %s436 = int_to_ptr.vmem [resolvable:$true] %s435
    %438 = dma.hbm_to_vmem [thread:$0]  %s434, 16, %s436, %s83
    %s439 = sld [smem:[#allocation10 + %s392]]
    %s440 = sld [smem:[#allocation10 + %s393]]
    %s441 = ssub.f32 %s439, %s440
    %vm442 = vcmp.eq.s32.totalorder %v47, 6
    %v443 = vstv %s441
    %v444 = vsel %vm442, %v443, %v387
    %s445 = sadd.s32 %s45, 7
    %p446 = scmp.lt.s32.totalorder %s445, 7
    %s447 = scalar_select %p446, %s445, 7
    %s448 = sld [smem:[#allocation7 + %s447]]
    %s449 = sld [smem:[#allocation8 + %s447]]
    %s450 = sld [smem:[#allocation9 + %s447]]
    %s451 = scalar_lea.hbm %s3, %s448
    %s452 = scalar_lea.vmem [#allocation2], 7
    // Predicated region
    $region94: #{tpu_custom_call.1} parent=1 // pred_check
      _
    $region95: #{tpu_custom_call.1} parent=1 // pred_check_branch
      %454 = sbr.rel target = $region97
    $region96: #{tpu_custom_call.1} parent=1 // pred_region
      %455 = sst [smem:[#allocation16]] [#allocation59]
      %456 = sst [smem:[#allocation17]] [#allocation58]
    $region97: #{tpu_custom_call.1} parent=1 // pred_fallthru
      _
    %458 = shalt.err (0)
    %s460 = sshll.u32 %s451, 4
    %s461 = int_to_ptr.hbm [resolvable:$true] %s460
    %s462 = sshll.u32 %s452, 4
    %s463 = int_to_ptr.vmem [resolvable:$true] %s462
    %465 = dma.hbm_to_vmem [thread:$0]  %s461, 16, %s463, [#allocation5]
    %s466 = scalar_lea.hbm %s4, %s449
    %s467 = scalar_lea.vmem [#allocation3], 7
    // Predicated region
    $region98: #{tpu_custom_call.1} parent=1 // pred_check
      _
    $region99: #{tpu_custom_call.1} parent=1 // pred_check_branch
      %469 = sbr.rel target = $region101
    $region100: #{tpu_custom_call.1} parent=1 // pred_region
      %470 = sst [smem:[#allocation16]] [#allocation61]
      %471 = sst [smem:[#allocation17]] [#allocation60]
    $region101: #{tpu_custom_call.1} parent=1 // pred_fallthru
      _
    %473 = shalt.err (0)
    %s475 = sshll.u32 %s466, 4
    %s476 = int_to_ptr.hbm [resolvable:$true] %s475
    %s477 = sshll.u32 %s467, 4
    %s478 = int_to_ptr.vmem [resolvable:$true] %s477
    %480 = dma.hbm_to_vmem [thread:$0]  %s476, 16, %s478, %s68
    %s481 = scalar_lea.hbm %s4, %s450
    %s482 = scalar_lea.vmem [#allocation4], 7
    // Predicated region
    $region102: #{tpu_custom_call.1} parent=1 // pred_check
      _
    $region103: #{tpu_custom_call.1} parent=1 // pred_check_branch
      %484 = sbr.rel target = $region105
    $region104: #{tpu_custom_call.1} parent=1 // pred_region
      %485 = sst [smem:[#allocation16]] [#allocation63]
      %486 = sst [smem:[#allocation17]] [#allocation62]
    $region105: #{tpu_custom_call.1} parent=1 // pred_fallthru
      _
    %488 = shalt.err (0)
    %s490 = sshll.u32 %s481, 4
    %s491 = int_to_ptr.hbm [resolvable:$true] %s490
    %s492 = sshll.u32 %s482, 4
    %s493 = int_to_ptr.vmem [resolvable:$true] %s492
    %495 = dma.hbm_to_vmem [thread:$0]  %s491, 16, %s493, %s83
    %s496 = sld [smem:[#allocation10 + %s449]]
    %s497 = sld [smem:[#allocation10 + %s450]]
    %s498 = ssub.f32 %s496, %s497
    %vm499 = vcmp.eq.s32.totalorder %v47, 7
    %v500 = vstv %s498
    %v501 = vsel %vm499, %v500, %v444
    %s502 = smul.u32 1, 1
    %s503 = sshll.u32 %s502, 4
    %504 = dma.done [#allocation5], %s503
    %s505 = sshll.u32 %s502, 4
    %506 = dma.done %s68, %s505
    %s507 = sshll.u32 %s502, 4
    %508 = dma.done %s83, %s507
    %s509 = sshll.u32 %s502, 4
    %510 = dma.done [#allocation5], %s509
    %s511 = sshll.u32 %s502, 4
    %512 = dma.done %s68, %s511
    %s513 = sshll.u32 %s502, 4
    %514 = dma.done %s83, %s513
    %s515 = sshll.u32 %s502, 4
    %516 = dma.done [#allocation5], %s515
    %s517 = sshll.u32 %s502, 4
    %518 = dma.done %s68, %s517
    %s519 = sshll.u32 %s502, 4
    %520 = dma.done %s83, %s519
    %s521 = sshll.u32 %s502, 4
    %522 = dma.done [#allocation5], %s521
    %s523 = sshll.u32 %s502, 4
    %524 = dma.done %s68, %s523
    %s525 = sshll.u32 %s502, 4
    %526 = dma.done %s83, %s525
    %s527 = sshll.u32 %s502, 4
    %528 = dma.done [#allocation5], %s527
    %s529 = sshll.u32 %s502, 4
    %530 = dma.done %s68, %s529
    %s531 = sshll.u32 %s502, 4
    %532 = dma.done %s83, %s531
    %s533 = sshll.u32 %s502, 4
    %534 = dma.done [#allocation5], %s533
    %s535 = sshll.u32 %s502, 4
    %536 = dma.done %s68, %s535
    %s537 = sshll.u32 %s502, 4
    %538 = dma.done %s83, %s537
    %s539 = sshll.u32 %s502, 4
    %540 = dma.done [#allocation5], %s539
    %s541 = sshll.u32 %s502, 4
    %542 = dma.done %s68, %s541
    %s543 = sshll.u32 %s502, 4
    %544 = dma.done %s83, %s543
    %s545 = sshll.u32 %s502, 4
    %546 = dma.done [#allocation5], %s545
    %s547 = sshll.u32 %s502, 4
    %548 = dma.done %s68, %s547
    %s549 = sshll.u32 %s502, 4
    %550 = dma.done %s83, %s549
    %v551 = vld [vmem:[#allocation2] sm:$0xff]
    %v552 = vld [vmem:[#allocation3] sm:$0xff]
    %v553 = vld [vmem:[#allocation4] sm:$0xff]
    %v554 = vsub.f32 %v552, %v553
    %v555 = vmul.f32 %v551, %v554
    %556 = vmatpush.xpose.msra.mxu0 0.0
    %557 = vmatpush.xpose.msra.mxu0 0.0
    %558 = vmatpush.xpose.msra.mxu0 0.0
    %559 = vmatpush.xpose.msra.mxu0 0.0
    %560 = vmatpush.xpose.msra.mxu0 0.0
    %561 = vmatpush.xpose.msra.mxu0 0.0
    %562 = vmatpush.xpose.msra.mxu0 0.0
    %563 = vmatpush.xpose.msra.mxu0 0.0
    %564 = vmatpush.xpose.msra.mxu0 0.0
    %565 = vmatpush.xpose.msra.mxu0 0.0
    %566 = vmatpush.xpose.msra.mxu0 0.0
    %567 = vmatpush.xpose.msra.mxu0 0.0
    %568 = vmatpush.xpose.msra.mxu0 0.0
    %569 = vmatpush.xpose.msra.mxu0 0.0
    %570 = vmatpush.xpose.msra.mxu0 0.0
    %v571 = vand.u32 %v555, 4294901760
    %572 = vmatpush.xpose.msra.mxu0 %v571
    %573 = vmatmul.f32.gmra.mxu0 0.0
    %v574 = vpop.f32.mrf.mxu0
    %v575 = vadd.f32 %v501, %v574
    %576 = vdwg.mxu0
    %577 = vmatpush.xpose.msra.mxu0 0.0
    %578 = vmatpush.xpose.msra.mxu0 0.0
    %579 = vmatpush.xpose.msra.mxu0 0.0
    %580 = vmatpush.xpose.msra.mxu0 0.0
    %581 = vmatpush.xpose.msra.mxu0 0.0
    %582 = vmatpush.xpose.msra.mxu0 0.0
    %583 = vmatpush.xpose.msra.mxu0 0.0
    %584 = vmatpush.xpose.msra.mxu0 0.0
    %585 = vmatpush.xpose.msra.mxu0 0.0
    %586 = vmatpush.xpose.msra.mxu0 0.0
    %587 = vmatpush.xpose.msra.mxu0 0.0
    %588 = vmatpush.xpose.msra.mxu0 0.0
    %589 = vmatpush.xpose.msra.mxu0 0.0
    %590 = vmatpush.xpose.msra.mxu0 0.0
    %591 = vmatpush.xpose.msra.mxu0 0.0
    %v592 = vand.u32 %v555, 4294901760
    %v593 = vsub.f32 %v555, %v592
    %v594 = vand.u32 %v593, 4294901760
    %v595 = vsub.f32 %v593, %v594
    %v596 = vand.u32 %v595, 4294901760
    %597 = vmatpush.xpose.msra.mxu0 %v596
    %598 = vmatmul.f32.gmra.mxu0 1.0
    %v599 = vpop.f32.mrf.mxu0
    %v600 = vadd.f32 %v575, %v599
    %601 = vdwg.mxu0
    %602 = vmatpush.xpose.msra.mxu0 0.0
    %603 = vmatpush.xpose.msra.mxu0 0.0
    %604 = vmatpush.xpose.msra.mxu0 0.0
    %605 = vmatpush.xpose.msra.mxu0 0.0
    %606 = vmatpush.xpose.msra.mxu0 0.0
    %607 = vmatpush.xpose.msra.mxu0 0.0
    %608 = vmatpush.xpose.msra.mxu0 0.0
    %609 = vmatpush.xpose.msra.mxu0 0.0
    %610 = vmatpush.xpose.msra.mxu0 0.0
    %611 = vmatpush.xpose.msra.mxu0 0.0
    %612 = vmatpush.xpose.msra.mxu0 0.0
    %613 = vmatpush.xpose.msra.mxu0 0.0
    %614 = vmatpush.xpose.msra.mxu0 0.0
    %615 = vmatpush.xpose.msra.mxu0 0.0
    %616 = vmatpush.xpose.msra.mxu0 0.0
    %v617 = vand.u32 %v555, 4294901760
    %v618 = vsub.f32 %v555, %v617
    %619 = vmatpush.xpose.msra.mxu0 %v618
    %620 = vmatmul.f32.gmra.mxu0 0.0
    %v621 = vpop.f32.mrf.mxu0
    %v622 = vadd.f32 %v600, %v621
    %623 = vdwg.mxu0
    %624 = vmatpush.xpose.msra.mxu0 0.0
    %625 = vmatpush.xpose.msra.mxu0 0.0
    %626 = vmatpush.xpose.msra.mxu0 0.0
    %627 = vmatpush.xpose.msra.mxu0 0.0
    %628 = vmatpush.xpose.msra.mxu0 0.0
    %629 = vmatpush.xpose.msra.mxu0 0.0
    %630 = vmatpush.xpose.msra.mxu0 0.0
    %631 = vmatpush.xpose.msra.mxu0 0.0
    %632 = vmatpush.xpose.msra.mxu0 0.0
    %633 = vmatpush.xpose.msra.mxu0 0.0
    %634 = vmatpush.xpose.msra.mxu0 0.0
    %635 = vmatpush.xpose.msra.mxu0 0.0
    %636 = vmatpush.xpose.msra.mxu0 0.0
    %637 = vmatpush.xpose.msra.mxu0 0.0
    %638 = vmatpush.xpose.msra.mxu0 0.0
    %v639 = vand.u32 %v555, 4294901760
    %640 = vmatpush.xpose.msra.mxu0 %v639
    %641 = vmatmul.f32.gmra.mxu0 0.0
    %v642 = vpop.f32.mrf.mxu0
    %v643 = vadd.f32 %v622, %v642
    %644 = vdwg.mxu0
    %645 = vmatpush.xpose.msra.mxu0 0.0
    %646 = vmatpush.xpose.msra.mxu0 0.0
    %647 = vmatpush.xpose.msra.mxu0 0.0
    %648 = vmatpush.xpose.msra.mxu0 0.0
    %649 = vmatpush.xpose.msra.mxu0 0.0
    %650 = vmatpush.xpose.msra.mxu0 0.0
    %651 = vmatpush.xpose.msra.mxu0 0.0
    %652 = vmatpush.xpose.msra.mxu0 0.0
    %653 = vmatpush.xpose.msra.mxu0 0.0
    %654 = vmatpush.xpose.msra.mxu0 0.0
    %655 = vmatpush.xpose.msra.mxu0 0.0
    %656 = vmatpush.xpose.msra.mxu0 0.0
    %657 = vmatpush.xpose.msra.mxu0 0.0
    %658 = vmatpush.xpose.msra.mxu0 0.0
    %659 = vmatpush.xpose.msra.mxu0 0.0
    %v660 = vand.u32 %v555, 4294901760
    %v661 = vsub.f32 %v555, %v660
    %v662 = vand.u32 %v661, 4294901760
    %663 = vmatpush.xpose.msra.mxu0 %v662
    %664 = vmatmul.f32.gmra.mxu0 1.0
    %v665 = vpop.f32.mrf.mxu0
    %v666 = vadd.f32 %v643, %v665
    %667 = vdwg.mxu0
    %668 = vmatpush.xpose.msra.mxu0 0.0
    %669 = vmatpush.xpose.msra.mxu0 0.0
    %670 = vmatpush.xpose.msra.mxu0 0.0
    %671 = vmatpush.xpose.msra.mxu0 0.0
    %672 = vmatpush.xpose.msra.mxu0 0.0
    %673 = vmatpush.xpose.msra.mxu0 0.0
    %674 = vmatpush.xpose.msra.mxu0 0.0
    %675 = vmatpush.xpose.msra.mxu0 0.0
    %676 = vmatpush.xpose.msra.mxu0 0.0
    %677 = vmatpush.xpose.msra.mxu0 0.0
    %678 = vmatpush.xpose.msra.mxu0 0.0
    %679 = vmatpush.xpose.msra.mxu0 0.0
    %680 = vmatpush.xpose.msra.mxu0 0.0
    %681 = vmatpush.xpose.msra.mxu0 0.0
    %682 = vmatpush.xpose.msra.mxu0 0.0
    %v683 = vand.u32 %v555, 4294901760
    %684 = vmatpush.xpose.msra.mxu0 %v683
    %685 = vmatmul.f32.gmra.mxu0 1.0
    %v686 = vpop.f32.mrf.mxu0
    %v687 = vadd.f32 %v666, %v686
    %688 = vdwg.mxu0
    %vm689 = vcmask 57344
    %690 = vst.msk [vmem:[#allocation13] sm:$0x1] %vm689, %v687
    // Predicated region
    $region106: #{tpu_custom_call.1} parent=1 // pred_check
      _
    $region107: #{tpu_custom_call.1} parent=1 // pred_check_branch
      %692 = sbr.rel (0) target = $region109
    $region108: #{tpu_custom_call.1} parent=1 // pred_region
      %694 = vsyncadd [#allocation11], 0
      %s696 = sshll.u32 [#allocation13], 4
      %s697 = int_to_ptr.vmem [resolvable:$true] %s696
      %s698 = sshll.u32 %s6, 4
      %s699 = int_to_ptr.hbm [resolvable:$true] %s698
      %701 = dma.vmem_to_hbm [thread:$0]  %s697, 16, %s699, [#allocation11]
    $region109: #{tpu_custom_call.1} parent=1 // pred_fallthru
      _
    // Predicated region
    $region110: #{tpu_custom_call.1} parent=1 // pred_check
      _
    $region111: #{tpu_custom_call.1} parent=1 // pred_check_branch
      %703 = sbr.rel (0) target = $region113
    $region112: #{tpu_custom_call.1} parent=1 // pred_region
      %705 = dma.done [#allocation11], 16
    $region113: #{tpu_custom_call.1} parent=1 // pred_fallthru
      _
    %706 = vsyncpa [#allocation11], 1
    %707 = vsyncpa [#allocation12], 1
  %708 = vsyncmov [#allocation5]
  %s709 = vpop.sfrf %708
  %p710 = scmp.eq.s32.totalorder %s709, 0
  %p711 = pneg %p710
  %713 = shalt.err (%p711)
  %s714 = scalar_lea.sflag [#allocation5], 1
  %715 = vsyncmov %s714
  %s716 = vpop.sfrf %715
  %p717 = scmp.eq.s32.totalorder %s716, 0
  %p718 = pneg %p717
  %720 = shalt.err (%p718)
  %s721 = scalar_lea.sflag [#allocation5], 2
  %722 = vsyncmov %s721
  %s723 = vpop.sfrf %722
  %p724 = scmp.eq.s32.totalorder %s723, 0
  %p725 = pneg %p724
  %727 = shalt.err (%p725)

</llo_original>
